<compile_context>
chip_gen: v6e
topology: v6e:2x2x1
jax: 0.10.0
libtpu: 0.0.40
codegen_flags: <defaults>
</compile_context>

<pallas_src>
import functools

import jax
import jax.numpy as jnp
from jax.experimental import pallas as pl
from jax.experimental.pallas import tpu as pltpu

GROUP = 32            # batch rows packed per 128-lane vector row (128 / 4 features)
D_IN, D_HID, D_OUT = 4, 6, 4


def _round_up(x, m):
    return ((x + m - 1) // m) * m


def decoder_kernel(z_ref, w1_ref, b1_ref, w2_ref, b2_ref, o_ref):
    # z_ref : [ts, 128]   32 batch rows interleaved per vector row
    # w1_ref: [128, 192]  block-diagonal (32 copies of w1.T)
    # b1_ref: [1, 192]
    # w2_ref: [192, 128]  block-diagonal (32 copies of w2.T)
    # b2_ref: [1, 128]
    # o_ref : [ts, 128]
    z = z_ref[...]

    # Layer 1: Linear(4 -> 6) + ReLU as a block-diagonal MXU matmul.
    h = jnp.dot(z, w1_ref[...],
                preferred_element_type=jnp.float32,
                precision=jax.lax.Precision.HIGHEST) + b1_ref[...]
    h = jnp.maximum(h, 0.0)                                   # [ts, 192]

    # Layer 2: Linear(6 -> 4) + Sigmoid (exp/recip on the EUP slot).
    y = jnp.dot(h, w2_ref[...],
                preferred_element_type=jnp.float32,
                precision=jax.lax.Precision.HIGHEST) + b2_ref[...]
    o_ref[...] = jax.nn.sigmoid(y)                            # [ts, 128]


@functools.partial(jax.jit, static_argnames=("tile_rows",))
def decoder_forward(z, w1, b1, w2, b2, *, tile_rows=16384):
    """z: [B, 4] f32. Weights in PyTorch layout: w1 [6,4], b1 [6], w2 [4,6], b2 [4]."""
    B, fin = z.shape
    assert fin == D_IN, "Decoder expects latent dim 4"

    # tile_rows rows -> tile_rows/32 sublanes; keep it a multiple of 256 so the
    # (8, 128) tiling constraint holds on the [rows, 128] view.
    quantum = GROUP * 8
    tr = _round_up(min(tile_rows, _round_up(B, quantum)), quantum)
    Bp = _round_up(B, tr)
    if Bp != B:
        z = jnp.pad(z, ((0, Bp - B), (0, 0)))

    # Free contiguous reshape (no data movement): lane-dense [rows, 128] view.
    zr = z.reshape(Bp // GROUP, GROUP * D_IN)
    rows = Bp // GROUP
    ts = tr // GROUP

    # Block-diagonal weights / tiled biases: O(1)-sized prep (precompute once
    # outside the hot loop in real use).
    eye = jnp.eye(GROUP, dtype=jnp.float32)
    w1big = jnp.kron(eye, w1.T.astype(jnp.float32))            # [128, 192]
    w2big = jnp.kron(eye, w2.T.astype(jnp.float32))            # [192, 128]
    b1big = jnp.tile(b1.astype(jnp.float32), GROUP).reshape(1, GROUP * D_HID)
    b2big = jnp.tile(b2.astype(jnp.float32), GROUP).reshape(1, GROUP * D_OUT)

    out = pl.pallas_call(
        decoder_kernel,
        out_shape=jax.ShapeDtypeStruct((rows, GROUP * D_OUT), jnp.float32),
        grid=(rows // ts,),
        in_specs=[
            pl.BlockSpec((ts, GROUP * D_IN), lambda i: (i, 0)),             # z tiles
            pl.BlockSpec((GROUP * D_IN, GROUP * D_HID), lambda i: (0, 0)),  # w1big (VMEM-resident)
            pl.BlockSpec((1, GROUP * D_HID), lambda i: (0, 0)),             # b1big
            pl.BlockSpec((GROUP * D_HID, GROUP * D_OUT), lambda i: (0, 0)), # w2big
            pl.BlockSpec((1, GROUP * D_OUT), lambda i: (0, 0)),             # b2big
        ],
        out_specs=pl.BlockSpec((ts, GROUP * D_OUT), lambda i: (i, 0)),
        compiler_params=pltpu.CompilerParams(
            dimension_semantics=("parallel",),
        ),
    )(zr, w1big, b1big, w2big, b2big)

    return out.reshape(Bp, D_OUT)[:B]


def init_params(key):
    # Deterministic init mimicking nn.Linear's U(-1/sqrt(fan_in), 1/sqrt(fan_in)).
    k1, k2, k3, k4 = jax.random.split(key, 4)
    bound1 = 1.0 / jnp.sqrt(4.0)
    bound2 = 1.0 / jnp.sqrt(6.0)
    # PyTorch layout: weight is [out_features, in_features], bias is [out_features].
    w1 = jax.random.uniform(k1, (6, 4), jnp.float32, -bound1, bound1)
    b1 = jax.random.uniform(k2, (6,), jnp.float32, -bound1, bound1)
    w2 = jax.random.uniform(k3, (4, 6), jnp.float32, -bound2, bound2)
    b2 = jax.random.uniform(k4, (4,), jnp.float32, -bound2, bound2)
    return w1, b1, w2, b2


def reference_forward(z, w1, b1, w2, b2):
    h = jnp.maximum(
        jnp.dot(z, w1.T, precision=jax.lax.Precision.HIGHEST) + b1, 0.0)
    return jax.nn.sigmoid(
        jnp.dot(h, w2.T, precision=jax.lax.Precision.HIGHEST) + b2)


if __name__ == "__main__":
    key = jax.random.PRNGKey(0)
    kz, kp = jax.random.split(key)
    w1, b1, w2, b2 = init_params(kp)

    # Main batched case: 2048 latents of dim 4 (one lane-dense [64,128] tile).
    B = 2048
    z = jax.random.normal(kz, (B, 4), jnp.float32)
    out = jax.block_until_ready(decoder_forward(z, w1, b1, w2, b2))
    ref = reference_forward(z, w1, b1, w2, b2)
    assert out.shape == (B, 4)
    assert jnp.allclose(out, ref, atol=1e-4, rtol=1e-4), "mismatch vs reference"

    # Ragged batch exercises the pad-and-slice path.
    z_small = jax.random.normal(kz, (77, 4), jnp.float32)
    out_small = jax.block_until_ready(decoder_forward(z_small, w1, b1, w2, b2))
    ref_small = reference_forward(z_small, w1, b1, w2, b2)
    assert out_small.shape == (77, 4)
    assert jnp.allclose(out_small, ref_small, atol=1e-4, rtol=1e-4), "ragged mismatch"

    # Larger batch exercises a multi-step (double-buffered) grid.
    z_big = jax.random.normal(kz, (40960, 4), jnp.float32)
    out_big = jax.block_until_ready(
        decoder_forward(z_big, w1, b1, w2, b2, tile_rows=16384))
    ref_big = reference_forward(z_big, w1, b1, w2, b2)
    assert out_big.shape == (40960, 4)
    assert jnp.allclose(out_big, ref_big, atol=1e-4, rtol=1e-4), "pipelined mismatch"

    print("KERNEL_OK")
</pallas_src>

<mosaic_0001>
module attributes {stable_mosaic.version = 11 : i64} {
  func.func @decoder_kernel(%arg0: i32, %arg1: memref<64x128xf32, #tpu.memory_space<vmem>>, %arg2: memref<128x192xf32, #tpu.memory_space<vmem>>, %arg3: memref<1x192xf32, #tpu.memory_space<vmem>>, %arg4: memref<192x128xf32, #tpu.memory_space<vmem>>, %arg5: memref<1x128xf32, #tpu.memory_space<vmem>>, %arg6: memref<64x128xf32, #tpu.memory_space<vmem>>) attributes {dimension_semantics = [#tpu.dimension_semantics<parallel>], iteration_bounds = array<i64: 1>, scalar_prefetch = 0 : i64, scratch_operands = 0 : i64, tpu.core_type = #tpu.core_type<tc>, window_params = [{transform_indices = @transform_0, window_bounds = array<i64: 64, 128>}, {pipeline_mode = #tpu.pipeline_mode<synchronous>, transform_indices = @transform_1, window_bounds = array<i64: 128, 192>}, {pipeline_mode = #tpu.pipeline_mode<synchronous>, transform_indices = @transform_2, window_bounds = array<i64: 1, 192>}, {pipeline_mode = #tpu.pipeline_mode<synchronous>, transform_indices = @transform_3, window_bounds = array<i64: 192, 128>}, {pipeline_mode = #tpu.pipeline_mode<synchronous>, transform_indices = @transform_4, window_bounds = array<i64: 1, 128>}, {transform_indices = @transform_5, window_bounds = array<i64: 64, 128>}]} {
    %c0 = arith.constant 0 : index
    %c0_0 = arith.constant 0 : index
    %0 = vector.load %arg1[%c0, %c0_0] : memref<64x128xf32, #tpu.memory_space<vmem>>, vector<64x128xf32>
    %c0_1 = arith.constant 0 : index
    %c0_2 = arith.constant 0 : index
    %1 = vector.load %arg2[%c0_1, %c0_2] : memref<128x192xf32, #tpu.memory_space<vmem>>, vector<128x192xf32>
    %cst = arith.constant dense<0.000000e+00> : vector<64x192xf32>
    %2 = tpu.matmul %0, %1, %cst {dimension_numbers = #tpu.dot_dimension_numbers<[1], [0], [0], [1], [0, 0, 1, 1], [], []>, precision = #tpu.contract_precision<fp32>} : vector<64x128xf32>, vector<128x192xf32>, vector<64x192xf32> -> vector<64x192xf32>
    %c0_3 = arith.constant 0 : index
    %c0_4 = arith.constant 0 : index
    %3 = vector.load %arg3[%c0_3, %c0_4] : memref<1x192xf32, #tpu.memory_space<vmem>>, vector<1x192xf32>
    %4 = vector.broadcast %3 : vector<1x192xf32> to vector<64x192xf32>
    %5 = arith.addf %2, %4 : vector<64x192xf32>
    %cst_5 = arith.constant 0.000000e+00 : f32
    %6 = vector.broadcast %cst_5 : f32 to vector<64x192xf32>
    %7 = arith.maximumf %5, %6 : vector<64x192xf32>
    %c0_6 = arith.constant 0 : index
    %c0_7 = arith.constant 0 : index
    %8 = vector.load %arg4[%c0_6, %c0_7] : memref<192x128xf32, #tpu.memory_space<vmem>>, vector<192x128xf32>
    %cst_8 = arith.constant dense<0.000000e+00> : vector<64x128xf32>
    %9 = tpu.matmul %7, %8, %cst_8 {dimension_numbers = #tpu.dot_dimension_numbers<[1], [0], [0], [1], [0, 0, 1, 1], [], []>, precision = #tpu.contract_precision<fp32>} : vector<64x192xf32>, vector<192x128xf32>, vector<64x128xf32> -> vector<64x128xf32>
    %c0_9 = arith.constant 0 : index
    %c0_10 = arith.constant 0 : index
    %10 = vector.load %arg5[%c0_9, %c0_10] : memref<1x128xf32, #tpu.memory_space<vmem>>, vector<1x128xf32>
    %11 = vector.broadcast %10 : vector<1x128xf32> to vector<64x128xf32>
    %12 = arith.addf %9, %11 : vector<64x128xf32>
    %13 = arith.negf %12 : vector<64x128xf32>
    %14 = math.exp %13 : vector<64x128xf32>
    %cst_11 = arith.constant 1.000000e+00 : f32
    %15 = vector.broadcast %cst_11 : f32 to vector<64x128xf32>
    %16 = arith.addf %15, %14 : vector<64x128xf32>
    %17 = arith.divf %15, %16 : vector<64x128xf32>
    %c0_12 = arith.constant 0 : index
    %c0_13 = arith.constant 0 : index
    %18 = vector.load %arg6[%c0_12, %c0_13] : memref<64x128xf32, #tpu.memory_space<vmem>>, vector<64x128xf32>
    tpu.vector_store %arg6[%c0_12, %c0_13], %17 {strides = array<i32>} : memref<64x128xf32, #tpu.memory_space<vmem>>, vector<64x128xf32>,
    return
  }
  func.func @transform_0(%arg0: i32) -> (i32, i32) {
    %c0_i32 = arith.constant 0 : i32
    %c0_i32_0 = arith.constant 0 : i32
    return %arg0, %c0_i32 : i32, i32
  }
  func.func @transform_1(%arg0: i32) -> (i32, i32) {
    %c0_i32 = arith.constant 0 : i32
    %c0_i32_0 = arith.constant 0 : i32
    %c0_i32_1 = arith.constant 0 : i32
    return %c0_i32, %c0_i32_0 : i32, i32
  }
  func.func @transform_2(%arg0: i32) -> (i32, i32) {
    %c0_i32 = arith.constant 0 : i32
    %c0_i32_0 = arith.constant 0 : i32
    %c0_i32_1 = arith.constant 0 : i32
    return %c0_i32, %c0_i32_0 : i32, i32
  }
  func.func @transform_3(%arg0: i32) -> (i32, i32) {
    %c0_i32 = arith.constant 0 : i32
    %c0_i32_0 = arith.constant 0 : i32
    %c0_i32_1 = arith.constant 0 : i32
    return %c0_i32, %c0_i32_0 : i32, i32
  }
  func.func @transform_4(%arg0: i32) -> (i32, i32) {
    %c0_i32 = arith.constant 0 : i32
    %c0_i32_0 = arith.constant 0 : i32
    %c0_i32_1 = arith.constant 0 : i32
    return %c0_i32, %c0_i32_0 : i32, i32
  }
  func.func @transform_5(%arg0: i32) -> (i32, i32) {
    %c0_i32 = arith.constant 0 : i32
    %c0_i32_0 = arith.constant 0 : i32
    return %arg0, %c0_i32 : i32, i32
  }
}

</mosaic_0001>

<llo_original>
// kernel: tile.13
$region0: #{tile.13}
  #allocation0 [shape = 's32[1]{0}', space=sflag, size = 0x4, scoped, tag = 'scoped memory for tile.13']
  %s0 = inlined_call_operand.vmem [shape: f32[6], index: 0, kind: input, shape index: {}]
  %s1 = inlined_call_operand.vmem [shape: f32[32,6], index: 1, kind: output, shape index: {}]
  // Predicated region
  $region2: #{tile.13} parent=0 // pred_check
    _
  $region3: #{tile.13} parent=0 // pred_check_branch
    %3 = sbr.rel (0) target = $region5
  $region4: #{tile.13} parent=0 // pred_region
    _
  $region5: #{tile.13} parent=0 // pred_fallthru
    _
  %v4 = vld [vmem:[%s0] ss:$0 sm:$0xff]
  %5 = vst [vmem:[%s1] sm:$0xff] %v4
  %s6 = scalar_lea.vmem %s1, 8
  %7 = vst [vmem:[%s6] sm:$0xff] %v4
  %s8 = scalar_lea.vmem %s1, 16
  %9 = vst [vmem:[%s8] sm:$0xff] %v4
  %s10 = scalar_lea.vmem %s1, 24
  %11 = vst [vmem:[%s10] sm:$0xff] %v4

// kernel: tile.14
$region0: #{tile.14}
  %s0 = inlined_call_operand.vmem [shape: f32[32,6], index: 0, kind: input, shape index: {}]
  %s1 = inlined_call_operand.vmem [shape: f32[1,192], index: 1, kind: output, shape index: {}]
  $region1: #{tile.14} parent=0
    #allocation0 [shape = 'u8[8192]{0}', space=vmem, size = 0x2000, scoped, tag = 'scoped mem for output reshape']
    %v2 = vld [vmem:[%s0] sm:$0x1]
    %vm3 = vcmask 48128
    %4 = vst.msk [vmem:[#allocation0] sm:$0x1] %vm3, %v2
    %s5 = scalar_lea.vmem %s0, 21
    %v6 = vld [vmem:[%s5] sm:$0x1]
    %s7 = scalar_lea.vmem %s0, 21
    %v8 = vld [vmem:[%s7] sm:$0x1]
    %vm9 = vcmask 15360
    %v10 = vsel %vm9, %v8, %v6
    %11 = vrot.lane.b32.xlu0 %v10, 126
    %v12 = vpop.permute.xlu0 %11
    %vm13 = vcmask 31744
    %s14 = scalar_lea.vmem [#allocation0], 8
    %15 = vst.msk [vmem:[%s14] sm:$0x1] %vm13, %v12
    %vm16 = vcmask 1048560
    %17 = vst.msk [vmem:[#allocation0] sm:$0x1] %vm16, %v12
    %s18 = scalar_lea.vmem %s0, 20
    %v19 = vld [vmem:[%s18] sm:$0x1]
    %20 = vrot.lane.b32.xlu0 %v19, 120
    %v21 = vpop.permute.xlu0 %20
    %vm22 = vcmask 1032128
    %23 = vst.msk [vmem:[#allocation0] sm:$0x1] %vm22, %v21
    %s24 = scalar_lea.vmem %s0, 19
    %v25 = vld [vmem:[%s24] sm:$0x1]
    %26 = vrot.lane.b32.xlu0 %v25, 114
    %v27 = vpop.permute.xlu0 %26
    %vm28 = vcmask 982928
    %29 = vst.msk [vmem:[#allocation0] sm:$0x1] %vm28, %v27
    %s30 = scalar_lea.vmem %s0, 18
    %v31 = vld [vmem:[%s30] sm:$0x1]
    %32 = vrot.lane.b32.xlu0 %v31, 108
    %v33 = vpop.permute.xlu0 %32
    %vm34 = vcmask 933728
    %35 = vst.msk [vmem:[#allocation0] sm:$0x1] %vm34, %v33
    %s36 = scalar_lea.vmem %s0, 17
    %v37 = vld [vmem:[%s36] sm:$0x1]
    %38 = vrot.lane.b32.xlu0 %v37, 102
    %v39 = vpop.permute.xlu0 %38
    %vm40 = vcmask 884528
    %41 = vst.msk [vmem:[#allocation0] sm:$0x1] %vm40, %v39
    %s42 = scalar_lea.vmem %s0, 16
    %v43 = vld [vmem:[%s42] sm:$0x1]
    %44 = vrot.lane.b32.xlu0 %v43, 96
    %v45 = vpop.permute.xlu0 %44
    %vm46 = vcmask 835328
    %47 = vst.msk [vmem:[#allocation0] sm:$0x1] %vm46, %v45
    %s48 = scalar_lea.vmem %s0, 15
    %v49 = vld [vmem:[%s48] sm:$0x1]
    %50 = vrot.lane.b32.xlu0 %v49, 90
    %v51 = vpop.permute.xlu0 %50
    %vm52 = vcmask 786128
    %53 = vst.msk [vmem:[#allocation0] sm:$0x1] %vm52, %v51
    %s54 = scalar_lea.vmem %s0, 14
    %v55 = vld [vmem:[%s54] sm:$0x1]
    %56 = vrot.lane.b32.xlu0 %v55, 84
    %v57 = vpop.permute.xlu0 %56
    %vm58 = vcmask 736928
    %59 = vst.msk [vmem:[#allocation0] sm:$0x1] %vm58, %v57
    %s60 = scalar_lea.vmem %s0, 13
    %v61 = vld [vmem:[%s60] sm:$0x1]
    %62 = vrot.lane.b32.xlu0 %v61, 78
    %v63 = vpop.permute.xlu0 %62
    %vm64 = vcmask 687728
    %65 = vst.msk [vmem:[#allocation0] sm:$0x1] %vm64, %v63
    %s66 = scalar_lea.vmem %s0, 12
    %v67 = vld [vmem:[%s66] sm:$0x1]
    %68 = vrot.lane.b32.xlu0 %v67, 72
    %v69 = vpop.permute.xlu0 %68
    %vm70 = vcmask 638528
    %71 = vst.msk [vmem:[#allocation0] sm:$0x1] %vm70, %v69
    %s72 = scalar_lea.vmem %s0, 11
    %v73 = vld [vmem:[%s72] sm:$0x1]
    %74 = vrot.lane.b32.xlu0 %v73, 66
    %v75 = vpop.permute.xlu0 %74
    %vm76 = vcmask 589328
    %77 = vst.msk [vmem:[#allocation0] sm:$0x1] %vm76, %v75
    %s78 = scalar_lea.vmem %s0, 10
    %v79 = vld [vmem:[%s78] sm:$0x1]
    %80 = vrot.lane.b32.xlu0 %v79, 60
    %v81 = vpop.permute.xlu0 %80
    %vm82 = vcmask 540128
    %83 = vst.msk [vmem:[#allocation0] sm:$0x1] %vm82, %v81
    %s84 = scalar_lea.vmem %s0, 31
    %v85 = vld [vmem:[%s84] sm:$0x1]
    %86 = vrot.lane.b32.xlu0 %v85, 58
    %v87 = vpop.permute.xlu0 %86
    %vm88 = vcmask 523728
    %s89 = scalar_lea.vmem [#allocation0], 8
    %90 = vst.msk [vmem:[%s89] sm:$0x1] %vm88, %v87
    %s91 = scalar_lea.vmem %s0, 9
    %v92 = vld [vmem:[%s91] sm:$0x1]
    %93 = vrot.lane.b32.xlu0 %v92, 54
    %v94 = vpop.permute.xlu0 %93
    %vm95 = vcmask 490928
    %96 = vst.msk [vmem:[#allocation0] sm:$0x1] %vm95, %v94
    %s97 = scalar_lea.vmem %s0, 30
    %v98 = vld [vmem:[%s97] sm:$0x1]
    %99 = vrot.lane.b32.xlu0 %v98, 52
    %v100 = vpop.permute.xlu0 %99
    %vm101 = vcmask 474528
    %s102 = scalar_lea.vmem [#allocation0], 8
    %103 = vst.msk [vmem:[%s102] sm:$0x1] %vm101, %v100
    %s104 = scalar_lea.vmem %s0, 8
    %v105 = vld [vmem:[%s104] sm:$0x1]
    %106 = vrot.lane.b32.xlu0 %v105, 48
    %v107 = vpop.permute.xlu0 %106
    %vm108 = vcmask 441728
    %109 = vst.msk [vmem:[#allocation0] sm:$0x1] %vm108, %v107
    %s110 = scalar_lea.vmem %s0, 29
    %v111 = vld [vmem:[%s110] sm:$0x1]
    %112 = vrot.lane.b32.xlu0 %v111, 46
    %v113 = vpop.permute.xlu0 %112
    %vm114 = vcmask 425328
    %s115 = scalar_lea.vmem [#allocation0], 8
    %116 = vst.msk [vmem:[%s115] sm:$0x1] %vm114, %v113
    %s117 = scalar_lea.vmem %s0, 7
    %v118 = vld [vmem:[%s117] sm:$0x1]
    %119 = vrot.lane.b32.xlu0 %v118, 42
    %v120 = vpop.permute.xlu0 %119
    %vm121 = vcmask 392528
    %122 = vst.msk [vmem:[#allocation0] sm:$0x1] %vm121, %v120
    %s123 = scalar_lea.vmem %s0, 28
    %v124 = vld [vmem:[%s123] sm:$0x1]
    %125 = vrot.lane.b32.xlu0 %v124, 40
    %v126 = vpop.permute.xlu0 %125
    %vm127 = vcmask 376128
    %s128 = scalar_lea.vmem [#allocation0], 8
    %129 = vst.msk [vmem:[%s128] sm:$0x1] %vm127, %v126
    %s130 = scalar_lea.vmem %s0, 6
    %v131 = vld [vmem:[%s130] sm:$0x1]
    %132 = vrot.lane.b32.xlu0 %v131, 36
    %v133 = vpop.permute.xlu0 %132
    %vm134 = vcmask 343328
    %135 = vst.msk [vmem:[#allocation0] sm:$0x1] %vm134, %v133
    %s136 = scalar_lea.vmem %s0, 27
    %v137 = vld [vmem:[%s136] sm:$0x1]
    %138 = vrot.lane.b32.xlu0 %v137, 34
    %v139 = vpop.permute.xlu0 %138
    %vm140 = vcmask 326928
    %s141 = scalar_lea.vmem [#allocation0], 8
    %142 = vst.msk [vmem:[%s141] sm:$0x1] %vm140, %v139
    %s143 = scalar_lea.vmem %s0, 5
    %v144 = vld [vmem:[%s143] sm:$0x1]
    %145 = vrot.lane.b32.xlu0 %v144, 30
    %v146 = vpop.permute.xlu0 %145
    %vm147 = vcmask 294128
    %148 = vst.msk [vmem:[#allocation0] sm:$0x1] %vm147, %v146
    %s149 = scalar_lea.vmem %s0, 26
    %v150 = vld [vmem:[%s149] sm:$0x1]
    %151 = vrot.lane.b32.xlu0 %v150, 28
    %v152 = vpop.permute.xlu0 %151
    %vm153 = vcmask 277728
    %s154 = scalar_lea.vmem [#allocation0], 8
    %155 = vst.msk [vmem:[%s154] sm:$0x1] %vm153, %v152
    %s156 = scalar_lea.vmem %s0, 4
    %v157 = vld [vmem:[%s156] sm:$0x1]
    %158 = vrot.lane.b32.xlu0 %v157, 24
    %v159 = vpop.permute.xlu0 %158
    %vm160 = vcmask 244928
    %161 = vst.msk [vmem:[#allocation0] sm:$0x1] %vm160, %v159
    %s162 = scalar_lea.vmem %s0, 25
    %v163 = vld [vmem:[%s162] sm:$0x1]
    %164 = vrot.lane.b32.xlu0 %v163, 22
    %v165 = vpop.permute.xlu0 %164
    %vm166 = vcmask 228528
    %s167 = scalar_lea.vmem [#allocation0], 8
    %168 = vst.msk [vmem:[%s167] sm:$0x1] %vm166, %v165
    %s169 = scalar_lea.vmem %s0, 3
    %v170 = vld [vmem:[%s169] sm:$0x1]
    %171 = vrot.lane.b32.xlu0 %v170, 18
    %v172 = vpop.permute.xlu0 %171
    %vm173 = vcmask 195728
    %174 = vst.msk [vmem:[#allocation0] sm:$0x1] %vm173, %v172
    %s175 = scalar_lea.vmem %s0, 24
    %v176 = vld [vmem:[%s175] sm:$0x1]
    %177 = vrot.lane.b32.xlu0 %v176, 16
    %v178 = vpop.permute.xlu0 %177
    %vm179 = vcmask 179328
    %s180 = scalar_lea.vmem [#allocation0], 8
    %181 = vst.msk [vmem:[%s180] sm:$0x1] %vm179, %v178
    %s182 = scalar_lea.vmem %s0, 2
    %v183 = vld [vmem:[%s182] sm:$0x1]
    %184 = vrot.lane.b32.xlu0 %v183, 12
    %v185 = vpop.permute.xlu0 %184
    %vm186 = vcmask 146528
    %187 = vst.msk [vmem:[#allocation0] sm:$0x1] %vm186, %v185
    %s188 = scalar_lea.vmem %s0, 23
    %v189 = vld [vmem:[%s188] sm:$0x1]
    %190 = vrot.lane.b32.xlu0 %v189, 10
    %v191 = vpop.permute.xlu0 %190
    %vm192 = vcmask 130128
    %s193 = scalar_lea.vmem [#allocation0], 8
    %194 = vst.msk [vmem:[%s193] sm:$0x1] %vm192, %v191
    %s195 = scalar_lea.vmem %s0, 1
    %v196 = vld [vmem:[%s195] sm:$0x1]
    %197 = vrot.lane.b32.xlu0 %v196, 6
    %v198 = vpop.permute.xlu0 %197
    %vm199 = vcmask 97328
    %200 = vst.msk [vmem:[#allocation0] sm:$0x1] %vm199, %v198
    %s201 = scalar_lea.vmem %s0, 22
    %v202 = vld [vmem:[%s201] sm:$0x1]
    %203 = vrot.lane.b32.xlu0 %v202, 4
    %v204 = vpop.permute.xlu0 %203
    %vm205 = vcmask 80928
    %s206 = scalar_lea.vmem [#allocation0], 8
    %207 = vst.msk [vmem:[%s206] sm:$0x1] %vm205, %v204
    %s209 = sshll.u32 1, 1
    %s210 = ssub.s32 %s209, 1
    %v212 = vld [vmem:[#allocation0] sm:%s210]
    %s213 = sshll.u32 1, 1
    %s214 = ssub.s32 %s213, 1
    %215 = vst [vmem:[%s1] sm:%s214] %v212
    %s216 = scalar_lea.vmem [#allocation0], 8
    %v217 = vld [vmem:[%s216] sm:%s210]
    %s218 = sshll.u32 1, 1
    %s219 = ssub.s32 %s218, 1
    %s220 = scalar_lea.vmem %s1, 1
    %221 = vst [vmem:[%s220] sm:%s219] %v217

// kernel: tile.18
$region0: #{tile.18}
  #allocation0 [shape = 's32[1]{0}', space=sflag, size = 0x4, scoped, tag = 'scoped memory for tile.18']
  %s0 = inlined_call_operand.vmem [shape: f32[4], index: 0, kind: input, shape index: {}]
  %s1 = inlined_call_operand.vmem [shape: f32[32,4], index: 1, kind: output, shape index: {}]
  // Predicated region
  $region2: #{tile.18} parent=0 // pred_check
    _
  $region3: #{tile.18} parent=0 // pred_check_branch
    %3 = sbr.rel (0) target = $region5
  $region4: #{tile.18} parent=0 // pred_region
    _
  $region5: #{tile.18} parent=0 // pred_fallthru
    _
  %v4 = vld [vmem:[%s0] ss:$0 sm:$0xff]
  %5 = vst [vmem:[%s1] sm:$0xff] %v4
  %s6 = scalar_lea.vmem %s1, 8
  %7 = vst [vmem:[%s6] sm:$0xff] %v4
  %s8 = scalar_lea.vmem %s1, 16
  %9 = vst [vmem:[%s8] sm:$0xff] %v4
  %s10 = scalar_lea.vmem %s1, 24
  %11 = vst [vmem:[%s10] sm:$0xff] %v4

// kernel: tile.19
$region0: #{tile.19}
  %s0 = inlined_call_operand.vmem [shape: f32[32,4], index: 0, kind: input, shape index: {}]
  %s1 = inlined_call_operand.vmem [shape: f32[1,128], index: 1, kind: output, shape index: {}]
  $region1: #{tile.19} parent=0
    #allocation0 [shape = 'u8[4096]{0}', space=vmem, size = 0x1000, scoped, tag = 'scoped mem for output reshape']
    %v2 = vld [vmem:[%s0] sm:$0x1]
    %vm3 = vcmask 31744
    %4 = vst.msk [vmem:[#allocation0] sm:$0x1] %vm3, %v2
    %s5 = scalar_lea.vmem %s0, 31
    %v6 = vld [vmem:[%s5] sm:$0x1]
    %7 = vrot.lane.b32.xlu0 %v6, 124
    %v8 = vpop.permute.xlu0 %7
    %vm9 = vcmask 1048544
    %10 = vst.msk [vmem:[#allocation0] sm:$0x1] %vm9, %v8
    %s11 = scalar_lea.vmem %s0, 30
    %v12 = vld [vmem:[%s11] sm:$0x1]
    %13 = vrot.lane.b32.xlu0 %v12, 120
    %v14 = vpop.permute.xlu0 %13
    %vm15 = vcmask 1015744
    %16 = vst.msk [vmem:[#allocation0] sm:$0x1] %vm15, %v14
    %s17 = scalar_lea.vmem %s0, 29
    %v18 = vld [vmem:[%s17] sm:$0x1]
    %19 = vrot.lane.b32.xlu0 %v18, 116
    %v20 = vpop.permute.xlu0 %19
    %vm21 = vcmask 982944
    %22 = vst.msk [vmem:[#allocation0] sm:$0x1] %vm21, %v20
    %s23 = scalar_lea.vmem %s0, 28
    %v24 = vld [vmem:[%s23] sm:$0x1]
    %25 = vrot.lane.b32.xlu0 %v24, 112
    %v26 = vpop.permute.xlu0 %25
    %vm27 = vcmask 950144
    %28 = vst.msk [vmem:[#allocation0] sm:$0x1] %vm27, %v26
    %s29 = scalar_lea.vmem %s0, 27
    %v30 = vld [vmem:[%s29] sm:$0x1]
    %31 = vrot.lane.b32.xlu0 %v30, 108
    %v32 = vpop.permute.xlu0 %31
    %vm33 = vcmask 917344
    %34 = vst.msk [vmem:[#allocation0] sm:$0x1] %vm33, %v32
    %s35 = scalar_lea.vmem %s0, 26
    %v36 = vld [vmem:[%s35] sm:$0x1]
    %37 = vrot.lane.b32.xlu0 %v36, 104
    %v38 = vpop.permute.xlu0 %37
    %vm39 = vcmask 884544
    %40 = vst.msk [vmem:[#allocation0] sm:$0x1] %vm39, %v38
    %s41 = scalar_lea.vmem %s0, 25
    %v42 = vld [vmem:[%s41] sm:$0x1]
    %43 = vrot.lane.b32.xlu0 %v42, 100
    %v44 = vpop.permute.xlu0 %43
    %vm45 = vcmask 851744
    %46 = vst.msk [vmem:[#allocation0] sm:$0x1] %vm45, %v44
    %s47 = scalar_lea.vmem %s0, 24
    %v48 = vld [vmem:[%s47] sm:$0x1]
    %49 = vrot.lane.b32.xlu0 %v48, 96
    %v50 = vpop.permute.xlu0 %49
    %vm51 = vcmask 818944
    %52 = vst.msk [vmem:[#allocation0] sm:$0x1] %vm51, %v50
    %s53 = scalar_lea.vmem %s0, 23
    %v54 = vld [vmem:[%s53] sm:$0x1]
    %55 = vrot.lane.b32.xlu0 %v54, 92
    %v56 = vpop.permute.xlu0 %55
    %vm57 = vcmask 786144
    %58 = vst.msk [vmem:[#allocation0] sm:$0x1] %vm57, %v56
    %s59 = scalar_lea.vmem %s0, 22
    %v60 = vld [vmem:[%s59] sm:$0x1]
    %61 = vrot.lane.b32.xlu0 %v60, 88
    %v62 = vpop.permute.xlu0 %61
    %vm63 = vcmask 753344
    %64 = vst.msk [vmem:[#allocation0] sm:$0x1] %vm63, %v62
    %s65 = scalar_lea.vmem %s0, 21
    %v66 = vld [vmem:[%s65] sm:$0x1]
    %67 = vrot.lane.b32.xlu0 %v66, 84
    %v68 = vpop.permute.xlu0 %67
    %vm69 = vcmask 720544
    %70 = vst.msk [vmem:[#allocation0] sm:$0x1] %vm69, %v68
    %s71 = scalar_lea.vmem %s0, 20
    %v72 = vld [vmem:[%s71] sm:$0x1]
    %73 = vrot.lane.b32.xlu0 %v72, 80
    %v74 = vpop.permute.xlu0 %73
    %vm75 = vcmask 687744
    %76 = vst.msk [vmem:[#allocation0] sm:$0x1] %vm75, %v74
    %s77 = scalar_lea.vmem %s0, 19
    %v78 = vld [vmem:[%s77] sm:$0x1]
    %79 = vrot.lane.b32.xlu0 %v78, 76
    %v80 = vpop.permute.xlu0 %79
    %vm81 = vcmask 654944
    %82 = vst.msk [vmem:[#allocation0] sm:$0x1] %vm81, %v80
    %s83 = scalar_lea.vmem %s0, 18
    %v84 = vld [vmem:[%s83] sm:$0x1]
    %85 = vrot.lane.b32.xlu0 %v84, 72
    %v86 = vpop.permute.xlu0 %85
    %vm87 = vcmask 622144
    %88 = vst.msk [vmem:[#allocation0] sm:$0x1] %vm87, %v86
    %s89 = scalar_lea.vmem %s0, 17
    %v90 = vld [vmem:[%s89] sm:$0x1]
    %91 = vrot.lane.b32.xlu0 %v90, 68
    %v92 = vpop.permute.xlu0 %91
    %vm93 = vcmask 589344
    %94 = vst.msk [vmem:[#allocation0] sm:$0x1] %vm93, %v92
    %s95 = scalar_lea.vmem %s0, 16
    %v96 = vld [vmem:[%s95] sm:$0x1]
    %97 = vrot.lane.b32.xlu0 %v96, 64
    %v98 = vpop.permute.xlu0 %97
    %vm99 = vcmask 556544
    %100 = vst.msk [vmem:[#allocation0] sm:$0x1] %vm99, %v98
    %s101 = scalar_lea.vmem %s0, 15
    %v102 = vld [vmem:[%s101] sm:$0x1]
    %103 = vrot.lane.b32.xlu0 %v102, 60
    %v104 = vpop.permute.xlu0 %103
    %vm105 = vcmask 523744
    %106 = vst.msk [vmem:[#allocation0] sm:$0x1] %vm105, %v104
    %s107 = scalar_lea.vmem %s0, 14
    %v108 = vld [vmem:[%s107] sm:$0x1]
    %109 = vrot.lane.b32.xlu0 %v108, 56
    %v110 = vpop.permute.xlu0 %109
    %vm111 = vcmask 490944
    %112 = vst.msk [vmem:[#allocation0] sm:$0x1] %vm111, %v110
    %s113 = scalar_lea.vmem %s0, 13
    %v114 = vld [vmem:[%s113] sm:$0x1]
    %115 = vrot.lane.b32.xlu0 %v114, 52
    %v116 = vpop.permute.xlu0 %115
    %vm117 = vcmask 458144
    %118 = vst.msk [vmem:[#allocation0] sm:$0x1] %vm117, %v116
    %s119 = scalar_lea.vmem %s0, 12
    %v120 = vld [vmem:[%s119] sm:$0x1]
    %121 = vrot.lane.b32.xlu0 %v120, 48
    %v122 = vpop.permute.xlu0 %121
    %vm123 = vcmask 425344
    %124 = vst.msk [vmem:[#allocation0] sm:$0x1] %vm123, %v122
    %s125 = scalar_lea.vmem %s0, 11
    %v126 = vld [vmem:[%s125] sm:$0x1]
    %127 = vrot.lane.b32.xlu0 %v126, 44
    %v128 = vpop.permute.xlu0 %127
    %vm129 = vcmask 392544
    %130 = vst.msk [vmem:[#allocation0] sm:$0x1] %vm129, %v128
    %s131 = scalar_lea.vmem %s0, 10
    %v132 = vld [vmem:[%s131] sm:$0x1]
    %133 = vrot.lane.b32.xlu0 %v132, 40
    %v134 = vpop.permute.xlu0 %133
    %vm135 = vcmask 359744
    %136 = vst.msk [vmem:[#allocation0] sm:$0x1] %vm135, %v134
    %s137 = scalar_lea.vmem %s0, 9
    %v138 = vld [vmem:[%s137] sm:$0x1]
    %139 = vrot.lane.b32.xlu0 %v138, 36
    %v140 = vpop.permute.xlu0 %139
    %vm141 = vcmask 326944
    %142 = vst.msk [vmem:[#allocation0] sm:$0x1] %vm141, %v140
    %s143 = scalar_lea.vmem %s0, 8
    %v144 = vld [vmem:[%s143] sm:$0x1]
    %145 = vrot.lane.b32.xlu0 %v144, 32
    %v146 = vpop.permute.xlu0 %145
    %vm147 = vcmask 294144
    %148 = vst.msk [vmem:[#allocation0] sm:$0x1] %vm147, %v146
    %s149 = scalar_lea.vmem %s0, 7
    %v150 = vld [vmem:[%s149] sm:$0x1]
    %151 = vrot.lane.b32.xlu0 %v150, 28
    %v152 = vpop.permute.xlu0 %151
    %vm153 = vcmask 261344
    %154 = vst.msk [vmem:[#allocation0] sm:$0x1] %vm153, %v152
    %s155 = scalar_lea.vmem %s0, 6
    %v156 = vld [vmem:[%s155] sm:$0x1]
    %157 = vrot.lane.b32.xlu0 %v156, 24
    %v158 = vpop.permute.xlu0 %157
    %vm159 = vcmask 228544
    %160 = vst.msk [vmem:[#allocation0] sm:$0x1] %vm159, %v158
    %s161 = scalar_lea.vmem %s0, 5
    %v162 = vld [vmem:[%s161] sm:$0x1]
    %163 = vrot.lane.b32.xlu0 %v162, 20
    %v164 = vpop.permute.xlu0 %163
    %vm165 = vcmask 195744
    %166 = vst.msk [vmem:[#allocation0] sm:$0x1] %vm165, %v164
    %s167 = scalar_lea.vmem %s0, 4
    %v168 = vld [vmem:[%s167] sm:$0x1]
    %169 = vrot.lane.b32.xlu0 %v168, 16
    %v170 = vpop.permute.xlu0 %169
    %vm171 = vcmask 162944
    %172 = vst.msk [vmem:[#allocation0] sm:$0x1] %vm171, %v170
    %s173 = scalar_lea.vmem %s0, 3
    %v174 = vld [vmem:[%s173] sm:$0x1]
    %175 = vrot.lane.b32.xlu0 %v174, 12
    %v176 = vpop.permute.xlu0 %175
    %vm177 = vcmask 130144
    %178 = vst.msk [vmem:[#allocation0] sm:$0x1] %vm177, %v176
    %s179 = scalar_lea.vmem %s0, 2
    %v180 = vld [vmem:[%s179] sm:$0x1]
    %181 = vrot.lane.b32.xlu0 %v180, 8
    %v182 = vpop.permute.xlu0 %181
    %vm183 = vcmask 97344
    %184 = vst.msk [vmem:[#allocation0] sm:$0x1] %vm183, %v182
    %s185 = scalar_lea.vmem %s0, 1
    %v186 = vld [vmem:[%s185] sm:$0x1]
    %187 = vrot.lane.b32.xlu0 %v186, 4
    %v188 = vpop.permute.xlu0 %187
    %vm189 = vcmask 64544
    %190 = vst.msk [vmem:[#allocation0] sm:$0x1] %vm189, %v188
    %s192 = sshll.u32 1, 1
    %s193 = ssub.s32 %s192, 1
    %v195 = vld [vmem:[#allocation0] sm:%s193]
    %s196 = sshll.u32 1, 1
    %s197 = ssub.s32 %s196, 1
    %198 = vst [vmem:[%s1] sm:%s197] %v195

// kernel: decoder_forward.1
$region0: #{decoder_forward.1}
  #allocation0 [shape = 'u32[]', space=smem, size = 0x4, offset = 0x4, fixed_abs, tag = 'smem constant byte address 0x4 - core index']
  #allocation1 [shape = 'u32[144,128]{1,0:T(1,128)}', space=vmem, size = 0x12000, scoped, tag = 'internal scratch']
  %s0 = inlined_call_operand.vmem [shape: f32[64,128], index: 0, kind: input, shape index: {}]
  %s1 = inlined_call_operand.vmem [shape: f32[128,192], index: 1, kind: input, shape index: {}]
  %s2 = inlined_call_operand.vmem [shape: f32[1,192], index: 2, kind: input, shape index: {}]
  %s3 = inlined_call_operand.vmem [shape: f32[192,128], index: 3, kind: input, shape index: {}]
  %s4 = inlined_call_operand.vmem [shape: f32[1,128], index: 4, kind: input, shape index: {}]
  %s5 = inlined_call_operand.vmem [shape: f32[64,128], index: 5, kind: output, shape index: {}]
  %s6 = sld [smem:[#allocation0]]
  $region30: #{decoder_forward.1} parent=0
    _
  %s8 = ssub.s32 1, %s6
  %s9 = scalar_select 0, %s8, %s6
  // Predicated region
  $region2: #{decoder_forward.1} parent=0 // pred_check
    _
  $region3: #{decoder_forward.1} parent=0 // pred_check_branch
    %11 = sbr.rel (0) target = $region5
  $region4: #{decoder_forward.1} parent=0 // pred_region
    _
  $region5: #{decoder_forward.1} parent=0 // pred_fallthru
    _
  // Predicated region
  $region6: #{decoder_forward.1} parent=0 // pred_check
    _
  $region7: #{decoder_forward.1} parent=0 // pred_check_branch
    %13 = sbr.rel (0) target = $region9
  $region8: #{decoder_forward.1} parent=0 // pred_region
    _
  $region9: #{decoder_forward.1} parent=0 // pred_fallthru
    _
  // Predicated region
  $region10: #{decoder_forward.1} parent=0 // pred_check
    _
  $region11: #{decoder_forward.1} parent=0 // pred_check_branch
    %15 = sbr.rel (0) target = $region13
  $region12: #{decoder_forward.1} parent=0 // pred_region
    _
  $region13: #{decoder_forward.1} parent=0 // pred_fallthru
    _
  // Predicated region
  $region14: #{decoder_forward.1} parent=0 // pred_check
    _
  $region15: #{decoder_forward.1} parent=0 // pred_check_branch
    %17 = sbr.rel (0) target = $region17
  $region16: #{decoder_forward.1} parent=0 // pred_region
    _
  $region17: #{decoder_forward.1} parent=0 // pred_fallthru
    _
  // Predicated region
  $region18: #{decoder_forward.1} parent=0 // pred_check
    _
  $region19: #{decoder_forward.1} parent=0 // pred_check_branch
    %19 = sbr.rel (0) target = $region21
  $region20: #{decoder_forward.1} parent=0 // pred_region
    _
  $region21: #{decoder_forward.1} parent=0 // pred_fallthru
    _
  %v20 = vld [vmem:[%s0] sm:$0xff]
  %v21 = vld [vmem:[%s0 + $0x8] sm:$0xff]
  %v22 = vld [vmem:[%s0 + $0x10] sm:$0xff]
  %v23 = vld [vmem:[%s0 + $0x18] sm:$0xff]
  %v24 = vld [vmem:[%s0 + $0x20] sm:$0xff]
  %v25 = vld [vmem:[%s0 + $0x28] sm:$0xff]
  %v26 = vld [vmem:[%s0 + $0x30] sm:$0xff]
  %v27 = vld [vmem:[%s0 + $0x38] sm:$0xff]
  %v28 = vld [vmem:[%s1] sm:$0xff]
  %v29 = vld [vmem:[%s1 + $0x8] sm:$0xff]
  %v30 = vld [vmem:[%s1 + $0x10] sm:$0xff]
  %v31 = vld [vmem:[%s1 + $0x18] sm:$0xff]
  %v32 = vld [vmem:[%s1 + $0x20] sm:$0xff]
  %v33 = vld [vmem:[%s1 + $0x28] sm:$0xff]
  %v34 = vld [vmem:[%s1 + $0x30] sm:$0xff]
  %v35 = vld [vmem:[%s1 + $0x38] sm:$0xff]
  %v36 = vld [vmem:[%s1 + $0x40] sm:$0xff]
  %v37 = vld [vmem:[%s1 + $0x48] sm:$0xff]
  %v38 = vld [vmem:[%s1 + $0x50] sm:$0xff]
  %v39 = vld [vmem:[%s1 + $0x58] sm:$0xff]
  %v40 = vld [vmem:[%s1 + $0x60] sm:$0xff]
  %v41 = vld [vmem:[%s1 + $0x68] sm:$0xff]
  %v42 = vld [vmem:[%s1 + $0x70] sm:$0xff]
  %v43 = vld [vmem:[%s1 + $0x78] sm:$0xff]
  %v44 = vld [vmem:[%s1 + $0x80] sm:$0xff]
  %v45 = vld [vmem:[%s1 + $0x88] sm:$0xff]
  %v46 = vld [vmem:[%s1 + $0x90] sm:$0xff]
  %v47 = vld [vmem:[%s1 + $0x98] sm:$0xff]
  %v48 = vld [vmem:[%s1 + $0xa0] sm:$0xff]
  %v49 = vld [vmem:[%s1 + $0xa8] sm:$0xff]
  %v50 = vld [vmem:[%s1 + $0xb0] sm:$0xff]
  %v51 = vld [vmem:[%s1 + $0xb8] sm:$0xff]
  %v52 = vld [vmem:[%s1 + $0xc0] sm:$0xff]
  %v53 = vld [vmem:[%s1 + $0xc8] sm:$0xff]
  %v54 = vld [vmem:[%s1 + $0xd0] sm:$0xff]
  %v55 = vld [vmem:[%s1 + $0xd8] sm:$0xff]
  %v56 = vld [vmem:[%s1 + $0xe0] sm:$0xff]
  %v57 = vld [vmem:[%s1 + $0xe8] sm:$0xff]
  %v58 = vld [vmem:[%s1 + $0xf0] sm:$0xff]
  %v59 = vld [vmem:[%s1 + $0xf8] sm:$0xff]
  %v60 = vld [vmem:[%s2] sm:$0x3]
  %v62 = vlaneseq
  %v63 = vshrl.u32 %v62, 7
  %v64 = vsub.s32 0, %v63
  %v65 = vrot.slane %v60, %v64
  %v66 = vlaneseq
  %v67 = vshrl.u32 %v66, 7
  %v68 = vsub.s32 1, %v67
  %v69 = vrot.slane %v60, %v68
  %v72 = vand.u32 %v59, 4294901760
  %73 = vmatprep.subr.mxu0 %v72
  %v74 = vand.u32 %v58, 4294901760
  %75 = vmatpush1.msra.mxu0 %v74
  %v76 = vand.u32 %v57, 4294901760
  %77 = vmatprep.subr.mxu0 %v76
  %v78 = vand.u32 %v56, 4294901760
  %79 = vmatpush1.msra.mxu0 %v78
  %v80 = vand.u32 %v55, 4294901760
  %81 = vmatprep.subr.mxu0 %v80
  %v82 = vand.u32 %v54, 4294901760
  %83 = vmatpush1.msra.mxu0 %v82
  %v84 = vand.u32 %v53, 4294901760
  %85 = vmatprep.subr.mxu0 %v84
  %v86 = vand.u32 %v52, 4294901760
  %87 = vmatpush1.msra.mxu0 %v86
  %v88 = vand.u32 %v51, 4294901760
  %89 = vmatprep.subr.mxu0 %v88
  %v90 = vand.u32 %v50, 4294901760
  %91 = vmatpush1.msra.mxu0 %v90
  %v92 = vand.u32 %v49, 4294901760
  %93 = vmatprep.subr.mxu0 %v92
  %v94 = vand.u32 %v48, 4294901760
  %95 = vmatpush1.msra.mxu0 %v94
  %v96 = vand.u32 %v47, 4294901760
  %97 = vmatprep.subr.mxu0 %v96
  %v98 = vand.u32 %v46, 4294901760
  %99 = vmatpush1.msra.mxu0 %v98
  %v100 = vand.u32 %v45, 4294901760
  %101 = vmatprep.subr.mxu0 %v100
  %v102 = vand.u32 %v44, 4294901760
  %103 = vmatpush1.msra.mxu0 %v102
  %v104 = vand.u32 %v43, 4294901760
  %105 = vmatprep.subr.mxu0 %v104
  %v106 = vand.u32 %v42, 4294901760
  %107 = vmatpush1.msra.mxu0 %v106
  %v108 = vand.u32 %v41, 4294901760
  %109 = vmatprep.subr.mxu0 %v108
  %v110 = vand.u32 %v40, 4294901760
  %111 = vmatpush1.msra.mxu0 %v110
  %v112 = vand.u32 %v39, 4294901760
  %113 = vmatprep.subr.mxu0 %v112
  %v114 = vand.u32 %v38, 4294901760
  %115 = vmatpush1.msra.mxu0 %v114
  %v116 = vand.u32 %v37, 4294901760
  %117 = vmatprep.subr.mxu0 %v116
  %v118 = vand.u32 %v36, 4294901760
  %119 = vmatpush1.msra.mxu0 %v118
  %v120 = vand.u32 %v35, 4294901760
  %121 = vmatprep.subr.mxu0 %v120
  %v122 = vand.u32 %v34, 4294901760
  %123 = vmatpush1.msra.mxu0 %v122
  %v124 = vand.u32 %v33, 4294901760
  %125 = vmatprep.subr.mxu0 %v124
  %v126 = vand.u32 %v32, 4294901760
  %127 = vmatpush1.msra.mxu0 %v126
  %v128 = vand.u32 %v31, 4294901760
  %129 = vmatprep.subr.mxu0 %v128
  %v130 = vand.u32 %v30, 4294901760
  %131 = vmatpush1.msra.mxu0 %v130
  %v132 = vand.u32 %v29, 4294901760
  %133 = vmatprep.subr.mxu0 %v132
  %v134 = vand.u32 %v28, 4294901760
  %135 = vmatpush1.msra.mxu0 %v134
  %136 = vmatprep.subr.mxu0 0.0
  %137 = vmatpush2.msra.mxu0 0.0
  %138 = vmatprep.subr.mxu0 0.0
  %139 = vmatpush2.msra.mxu0 0.0
  %140 = vmatprep.subr.mxu0 0.0
  %141 = vmatpush2.msra.mxu0 0.0
  %142 = vmatprep.subr.mxu0 0.0
  %143 = vmatpush2.msra.mxu0 0.0
  %144 = vmatprep.subr.mxu0 0.0
  %145 = vmatpush2.msra.mxu0 0.0
  %146 = vmatprep.subr.mxu0 0.0
  %147 = vmatpush2.msra.mxu0 0.0
  %148 = vmatprep.subr.mxu0 0.0
  %149 = vmatpush2.msra.mxu0 0.0
  %150 = vmatprep.subr.mxu0 0.0
  %151 = vmatpush2.msra.mxu0 0.0
  %152 = vmatprep.subr.mxu0 0.0
  %153 = vmatpush2.msra.mxu0 0.0
  %154 = vmatprep.subr.mxu0 0.0
  %155 = vmatpush2.msra.mxu0 0.0
  %156 = vmatprep.subr.mxu0 0.0
  %157 = vmatpush2.msra.mxu0 0.0
  %158 = vmatprep.subr.mxu0 0.0
  %159 = vmatpush2.msra.mxu0 0.0
  %160 = vmatprep.subr.mxu0 0.0
  %161 = vmatpush2.msra.mxu0 0.0
  %162 = vmatprep.subr.mxu0 0.0
  %163 = vmatpush2.msra.mxu0 0.0
  %164 = vmatprep.subr.mxu0 0.0
  %165 = vmatpush2.msra.mxu0 0.0
  %166 = vmatprep.subr.mxu0 0.0
  %167 = vmatpush2.msra.mxu0 0.0
  %168 = vmatprep.mubr.f32.mxu0 0.0
  %v169 = vand.u32 %v20, 4294901760
  %v170 = vsub.f32 %v20, %v169
  %v171 = vand.u32 %v170, 4294901760
  %v172 = vsub.f32 %v170, %v171
  %v173 = vand.u32 %v172, 4294901760
  %174 = vmatmul.mubr.f32.gmra.mxu0 %v173
  %v175 = vpop.f32.mrf.mxu0
  %v176 = vadd.f32 %v65, %v175
  %v177 = vpop.f32.mrf.mxu0
  %v178 = vadd.f32 %v69, %v177
  %179 = vmatprep.mubr.f32.mxu0 0.0
  %v180 = vand.u32 %v21, 4294901760
  %v181 = vsub.f32 %v21, %v180
  %v182 = vand.u32 %v181, 4294901760
  %v183 = vsub.f32 %v181, %v182
  %v184 = vand.u32 %v183, 4294901760
  %185 = vmatmul.mubr.f32.gmra.mxu0 %v184
  %v186 = vpop.f32.mrf.mxu0
  %v187 = vadd.f32 %v65, %v186
  %v188 = vpop.f32.mrf.mxu0
  %v189 = vadd.f32 %v69, %v188
  %190 = vmatprep.mubr.f32.mxu0 0.0
  %v191 = vand.u32 %v22, 4294901760
  %v192 = vsub.f32 %v22, %v191
  %v193 = vand.u32 %v192, 4294901760
  %v194 = vsub.f32 %v192, %v193
  %v195 = vand.u32 %v194, 4294901760
  %196 = vmatmul.mubr.f32.gmra.mxu0 %v195
  %v197 = vpop.f32.mrf.mxu0
  %v198 = vadd.f32 %v65, %v197
  %v199 = vpop.f32.mrf.mxu0
  %v200 = vadd.f32 %v69, %v199
  %201 = vmatprep.mubr.f32.mxu0 0.0
  %v202 = vand.u32 %v23, 4294901760
  %v203 = vsub.f32 %v23, %v202
  %v204 = vand.u32 %v203, 4294901760
  %v205 = vsub.f32 %v203, %v204
  %v206 = vand.u32 %v205, 4294901760
  %207 = vmatmul.mubr.f32.gmra.mxu0 %v206
  %v208 = vpop.f32.mrf.mxu0
  %v209 = vadd.f32 %v65, %v208
  %v210 = vpop.f32.mrf.mxu0
  %v211 = vadd.f32 %v69, %v210
  %212 = vmatprep.mubr.f32.mxu0 0.0
  %v213 = vand.u32 %v24, 4294901760
  %v214 = vsub.f32 %v24, %v213
  %v215 = vand.u32 %v214, 4294901760
  %v216 = vsub.f32 %v214, %v215
  %v217 = vand.u32 %v216, 4294901760
  %218 = vmatmul.mubr.f32.gmra.mxu0 %v217
  %v219 = vpop.f32.mrf.mxu0
  %v220 = vadd.f32 %v65, %v219
  %v221 = vpop.f32.mrf.mxu0
  %v222 = vadd.f32 %v69, %v221
  %223 = vmatprep.mubr.f32.mxu0 0.0
  %v224 = vand.u32 %v25, 4294901760
  %v225 = vsub.f32 %v25, %v224
  %v226 = vand.u32 %v225, 4294901760
  %v227 = vsub.f32 %v225, %v226
  %v228 = vand.u32 %v227, 4294901760
  %229 = vmatmul.mubr.f32.gmra.mxu0 %v228
  %v230 = vpop.f32.mrf.mxu0
  %v231 = vadd.f32 %v65, %v230
  %v232 = vpop.f32.mrf.mxu0
  %v233 = vadd.f32 %v69, %v232
  %234 = vmatprep.mubr.f32.mxu0 0.0
  %v235 = vand.u32 %v26, 4294901760
  %v236 = vsub.f32 %v26, %v235
  %v237 = vand.u32 %v236, 4294901760
  %v238 = vsub.f32 %v236, %v237
  %v239 = vand.u32 %v238, 4294901760
  %240 = vmatmul.mubr.f32.gmra.mxu0 %v239
  %v241 = vpop.f32.mrf.mxu0
  %v242 = vadd.f32 %v65, %v241
  %v243 = vpop.f32.mrf.mxu0
  %v244 = vadd.f32 %v69, %v243
  %245 = vmatprep.mubr.f32.mxu0 0.0
  %v246 = vand.u32 %v27, 4294901760
  %v247 = vsub.f32 %v27, %v246
  %v248 = vand.u32 %v247, 4294901760
  %v249 = vsub.f32 %v247, %v248
  %v250 = vand.u32 %v249, 4294901760
  %251 = vmatmul.mubr.f32.gmra.mxu0 %v250
  %v252 = vpop.f32.mrf.mxu0
  %v253 = vadd.f32 %v65, %v252
  %v254 = vpop.f32.mrf.mxu0
  %v255 = vadd.f32 %v69, %v254
  %256 = vdwg.mxu0
  %v257 = vand.u32 %v59, 4294901760
  %v258 = vsub.f32 %v59, %v257
  %v259 = vand.u32 %v258, 4294901760
  %v260 = vsub.f32 %v258, %v259
  %v261 = vand.u32 %v260, 4294901760
  %262 = vmatprep.subr.mxu0 %v261
  %v263 = vand.u32 %v58, 4294901760
  %v264 = vsub.f32 %v58, %v263
  %v265 = vand.u32 %v264, 4294901760
  %v266 = vsub.f32 %v264, %v265
  %v267 = vand.u32 %v266, 4294901760
  %268 = vmatpush1.msra.mxu0 %v267
  %v269 = vand.u32 %v57, 4294901760
  %v270 = vsub.f32 %v57, %v269
  %v271 = vand.u32 %v270, 4294901760
  %v272 = vsub.f32 %v270, %v271
  %v273 = vand.u32 %v272, 4294901760
  %274 = vmatprep.subr.mxu0 %v273
  %v275 = vand.u32 %v56, 4294901760
  %v276 = vsub.f32 %v56, %v275
  %v277 = vand.u32 %v276, 4294901760
  %v278 = vsub.f32 %v276, %v277
  %v279 = vand.u32 %v278, 4294901760
  %280 = vmatpush1.msra.mxu0 %v279
  %v281 = vand.u32 %v55, 4294901760
  %v282 = vsub.f32 %v55, %v281
  %v283 = vand.u32 %v282, 4294901760
  %v284 = vsub.f32 %v282, %v283
  %v285 = vand.u32 %v284, 4294901760
  %286 = vmatprep.subr.mxu0 %v285
  %v287 = vand.u32 %v54, 4294901760
  %v288 = vsub.f32 %v54, %v287
  %v289 = vand.u32 %v288, 4294901760
  %v290 = vsub.f32 %v288, %v289
  %v291 = vand.u32 %v290, 4294901760
  %292 = vmatpush1.msra.mxu0 %v291
  %v293 = vand.u32 %v53, 4294901760
  %v294 = vsub.f32 %v53, %v293
  %v295 = vand.u32 %v294, 4294901760
  %v296 = vsub.f32 %v294, %v295
  %v297 = vand.u32 %v296, 4294901760
  %298 = vmatprep.subr.mxu0 %v297
  %v299 = vand.u32 %v52, 4294901760
  %v300 = vsub.f32 %v52, %v299
  %v301 = vand.u32 %v300, 4294901760
  %v302 = vsub.f32 %v300, %v301
  %v303 = vand.u32 %v302, 4294901760
  %304 = vmatpush1.msra.mxu0 %v303
  %v305 = vand.u32 %v51, 4294901760
  %v306 = vsub.f32 %v51, %v305
  %v307 = vand.u32 %v306, 4294901760
  %v308 = vsub.f32 %v306, %v307
  %v309 = vand.u32 %v308, 4294901760
  %310 = vmatprep.subr.mxu0 %v309
  %v311 = vand.u32 %v50, 4294901760
  %v312 = vsub.f32 %v50, %v311
  %v313 = vand.u32 %v312, 4294901760
  %v314 = vsub.f32 %v312, %v313
  %v315 = vand.u32 %v314, 4294901760
  %316 = vmatpush1.msra.mxu0 %v315
  %v317 = vand.u32 %v49, 4294901760
  %v318 = vsub.f32 %v49, %v317
  %v319 = vand.u32 %v318, 4294901760
  %v320 = vsub.f32 %v318, %v319
  %v321 = vand.u32 %v320, 4294901760
  %322 = vmatprep.subr.mxu0 %v321
  %v323 = vand.u32 %v48, 4294901760
  %v324 = vsub.f32 %v48, %v323
  %v325 = vand.u32 %v324, 4294901760
  %v326 = vsub.f32 %v324, %v325
  %v327 = vand.u32 %v326, 4294901760
  %328 = vmatpush1.msra.mxu0 %v327
  %v329 = vand.u32 %v47, 4294901760
  %v330 = vsub.f32 %v47, %v329
  %v331 = vand.u32 %v330, 4294901760
  %v332 = vsub.f32 %v330, %v331
  %v333 = vand.u32 %v332, 4294901760
  %334 = vmatprep.subr.mxu0 %v333
  %v335 = vand.u32 %v46, 4294901760
  %v336 = vsub.f32 %v46, %v335
  %v337 = vand.u32 %v336, 4294901760
  %v338 = vsub.f32 %v336, %v337
  %v339 = vand.u32 %v338, 4294901760
  %340 = vmatpush1.msra.mxu0 %v339
  %v341 = vand.u32 %v45, 4294901760
  %v342 = vsub.f32 %v45, %v341
  %v343 = vand.u32 %v342, 4294901760
  %v344 = vsub.f32 %v342, %v343
  %v345 = vand.u32 %v344, 4294901760
  %346 = vmatprep.subr.mxu0 %v345
  %v347 = vand.u32 %v44, 4294901760
  %v348 = vsub.f32 %v44, %v347
  %v349 = vand.u32 %v348, 4294901760
  %v350 = vsub.f32 %v348, %v349
  %v351 = vand.u32 %v350, 4294901760
  %352 = vmatpush1.msra.mxu0 %v351
  %v353 = vand.u32 %v43, 4294901760
  %v354 = vsub.f32 %v43, %v353
  %v355 = vand.u32 %v354, 4294901760
  %v356 = vsub.f32 %v354, %v355
  %v357 = vand.u32 %v356, 4294901760
  %358 = vmatprep.subr.mxu0 %v357
  %v359 = vand.u32 %v42, 4294901760
  %v360 = vsub.f32 %v42, %v359
  %v361 = vand.u32 %v360, 4294901760
  %v362 = vsub.f32 %v360, %v361
  %v363 = vand.u32 %v362, 4294901760
  %364 = vmatpush1.msra.mxu0 %v363
  %v365 = vand.u32 %v41, 4294901760
  %v366 = vsub.f32 %v41, %v365
  %v367 = vand.u32 %v366, 4294901760
  %v368 = vsub.f32 %v366, %v367
  %v369 = vand.u32 %v368, 4294901760
  %370 = vmatprep.subr.mxu0 %v369
  %v371 = vand.u32 %v40, 4294901760
  %v372 = vsub.f32 %v40, %v371
  %v373 = vand.u32 %v372, 4294901760
  %v374 = vsub.f32 %v372, %v373
  %v375 = vand.u32 %v374, 4294901760
  %376 = vmatpush1.msra.mxu0 %v375
  %v377 = vand.u32 %v39, 4294901760
  %v378 = vsub.f32 %v39, %v377
  %v379 = vand.u32 %v378, 4294901760
  %v380 = vsub.f32 %v378, %v379
  %v381 = vand.u32 %v380, 4294901760
  %382 = vmatprep.subr.mxu0 %v381
  %v383 = vand.u32 %v38, 4294901760
  %v384 = vsub.f32 %v38, %v383
  %v385 = vand.u32 %v384, 4294901760
  %v386 = vsub.f32 %v384, %v385
  %v387 = vand.u32 %v386, 4294901760
  %388 = vmatpush1.msra.mxu0 %v387
  %v389 = vand.u32 %v37, 4294901760
  %v390 = vsub.f32 %v37, %v389
  %v391 = vand.u32 %v390, 4294901760
  %v392 = vsub.f32 %v390, %v391
  %v393 = vand.u32 %v392, 4294901760
  %394 = vmatprep.subr.mxu0 %v393
  %v395 = vand.u32 %v36, 4294901760
  %v396 = vsub.f32 %v36, %v395
  %v397 = vand.u32 %v396, 4294901760
  %v398 = vsub.f32 %v396, %v397
  %v399 = vand.u32 %v398, 4294901760
  %400 = vmatpush1.msra.mxu0 %v399
  %v401 = vand.u32 %v35, 4294901760
  %v402 = vsub.f32 %v35, %v401
  %v403 = vand.u32 %v402, 4294901760
  %v404 = vsub.f32 %v402, %v403
  %v405 = vand.u32 %v404, 4294901760
  %406 = vmatprep.subr.mxu0 %v405
  %v407 = vand.u32 %v34, 4294901760
  %v408 = vsub.f32 %v34, %v407
  %v409 = vand.u32 %v408, 4294901760
  %v410 = vsub.f32 %v408, %v409
  %v411 = vand.u32 %v410, 4294901760
  %412 = vmatpush1.msra.mxu0 %v411
  %v413 = vand.u32 %v33, 4294901760
  %v414 = vsub.f32 %v33, %v413
  %v415 = vand.u32 %v414, 4294901760
  %v416 = vsub.f32 %v414, %v415
  %v417 = vand.u32 %v416, 4294901760
  %418 = vmatprep.subr.mxu0 %v417
  %v419 = vand.u32 %v32, 4294901760
  %v420 = vsub.f32 %v32, %v419
  %v421 = vand.u32 %v420, 4294901760
  %v422 = vsub.f32 %v420, %v421
  %v423 = vand.u32 %v422, 4294901760
  %424 = vmatpush1.msra.mxu0 %v423
  %v425 = vand.u32 %v31, 4294901760
  %v426 = vsub.f32 %v31, %v425
  %v427 = vand.u32 %v426, 4294901760
  %v428 = vsub.f32 %v426, %v427
  %v429 = vand.u32 %v428, 4294901760
  %430 = vmatprep.subr.mxu0 %v429
  %v431 = vand.u32 %v30, 4294901760
  %v432 = vsub.f32 %v30, %v431
  %v433 = vand.u32 %v432, 4294901760
  %v434 = vsub.f32 %v432, %v433
  %v435 = vand.u32 %v434, 4294901760
  %436 = vmatpush1.msra.mxu0 %v435
  %v437 = vand.u32 %v29, 4294901760
  %v438 = vsub.f32 %v29, %v437
  %v439 = vand.u32 %v438, 4294901760
  %v440 = vsub.f32 %v438, %v439
  %v441 = vand.u32 %v440, 4294901760
  %442 = vmatprep.subr.mxu0 %v441
  %v443 = vand.u32 %v28, 4294901760
  %v444 = vsub.f32 %v28, %v443
  %v445 = vand.u32 %v444, 4294901760
  %v446 = vsub.f32 %v444, %v445
  %v447 = vand.u32 %v446, 4294901760
  %448 = vmatpush1.msra.mxu0 %v447
  %449 = vmatprep.subr.mxu0 0.0
  %450 = vmatpush2.msra.mxu0 0.0
  %451 = vmatprep.subr.mxu0 0.0
  %452 = vmatpush2.msra.mxu0 0.0
  %453 = vmatprep.subr.mxu0 0.0
  %454 = vmatpush2.msra.mxu0 0.0
  %455 = vmatprep.subr.mxu0 0.0
  %456 = vmatpush2.msra.mxu0 0.0
  %457 = vmatprep.subr.mxu0 0.0
  %458 = vmatpush2.msra.mxu0 0.0
  %459 = vmatprep.subr.mxu0 0.0
  %460 = vmatpush2.msra.mxu0 0.0
  %461 = vmatprep.subr.mxu0 0.0
  %462 = vmatpush2.msra.mxu0 0.0
  %463 = vmatprep.subr.mxu0 0.0
  %464 = vmatpush2.msra.mxu0 0.0
  %465 = vmatprep.subr.mxu0 0.0
  %466 = vmatpush2.msra.mxu0 0.0
  %467 = vmatprep.subr.mxu0 0.0
  %468 = vmatpush2.msra.mxu0 0.0
  %469 = vmatprep.subr.mxu0 0.0
  %470 = vmatpush2.msra.mxu0 0.0
  %471 = vmatprep.subr.mxu0 0.0
  %472 = vmatpush2.msra.mxu0 0.0
  %473 = vmatprep.subr.mxu0 0.0
  %474 = vmatpush2.msra.mxu0 0.0
  %475 = vmatprep.subr.mxu0 0.0
  %476 = vmatpush2.msra.mxu0 0.0
  %477 = vmatprep.subr.mxu0 0.0
  %478 = vmatpush2.msra.mxu0 0.0
  %479 = vmatprep.subr.mxu0 0.0
  %480 = vmatpush2.msra.mxu0 0.0
  %481 = vmatprep.mubr.f32.mxu0 0.0
  %v482 = vand.u32 %v20, 4294901760
  %483 = vmatmul.mubr.f32.gmra.mxu0 %v482
  %v484 = vpop.f32.mrf.mxu0
  %v485 = vadd.f32 %v176, %v484
  %v486 = vpop.f32.mrf.mxu0
  %v487 = vadd.f32 %v178, %v486
  %488 = vmatprep.mubr.f32.mxu0 0.0
  %v489 = vand.u32 %v21, 4294901760
  %490 = vmatmul.mubr.f32.gmra.mxu0 %v489
  %v491 = vpop.f32.mrf.mxu0
  %v492 = vadd.f32 %v187, %v491
  %v493 = vpop.f32.mrf.mxu0
  %v494 = vadd.f32 %v189, %v493
  %495 = vmatprep.mubr.f32.mxu0 0.0
  %v496 = vand.u32 %v22, 4294901760
  %497 = vmatmul.mubr.f32.gmra.mxu0 %v496
  %v498 = vpop.f32.mrf.mxu0
  %v499 = vadd.f32 %v198, %v498
  %v500 = vpop.f32.mrf.mxu0
  %v501 = vadd.f32 %v200, %v500
  %502 = vmatprep.mubr.f32.mxu0 0.0
  %v503 = vand.u32 %v23, 4294901760
  %504 = vmatmul.mubr.f32.gmra.mxu0 %v503
  %v505 = vpop.f32.mrf.mxu0
  %v506 = vadd.f32 %v209, %v505
  %v507 = vpop.f32.mrf.mxu0
  %v508 = vadd.f32 %v211, %v507
  %509 = vmatprep.mubr.f32.mxu0 0.0
  %v510 = vand.u32 %v24, 4294901760
  %511 = vmatmul.mubr.f32.gmra.mxu0 %v510
  %v512 = vpop.f32.mrf.mxu0
  %v513 = vadd.f32 %v220, %v512
  %v514 = vpop.f32.mrf.mxu0
  %v515 = vadd.f32 %v222, %v514
  %516 = vmatprep.mubr.f32.mxu0 0.0
  %v517 = vand.u32 %v25, 4294901760
  %518 = vmatmul.mubr.f32.gmra.mxu0 %v517
  %v519 = vpop.f32.mrf.mxu0
  %v520 = vadd.f32 %v231, %v519
  %v521 = vpop.f32.mrf.mxu0
  %v522 = vadd.f32 %v233, %v521
  %523 = vmatprep.mubr.f32.mxu0 0.0
  %v524 = vand.u32 %v26, 4294901760
  %525 = vmatmul.mubr.f32.gmra.mxu0 %v524
  %v526 = vpop.f32.mrf.mxu0
  %v527 = vadd.f32 %v242, %v526
  %v528 = vpop.f32.mrf.mxu0
  %v529 = vadd.f32 %v244, %v528
  %530 = vmatprep.mubr.f32.mxu0 0.0
  %v531 = vand.u32 %v27, 4294901760
  %532 = vmatmul.mubr.f32.gmra.mxu0 %v531
  %v533 = vpop.f32.mrf.mxu0
  %v534 = vadd.f32 %v253, %v533
  %v535 = vpop.f32.mrf.mxu0
  %v536 = vadd.f32 %v255, %v535
  %537 = vdwg.mxu0
  %v538 = vand.u32 %v59, 4294901760
  %v539 = vsub.f32 %v59, %v538
  %540 = vmatprep.subr.mxu0 %v539
  %v541 = vand.u32 %v58, 4294901760
  %v542 = vsub.f32 %v58, %v541
  %543 = vmatpush1.msra.mxu0 %v542
  %v544 = vand.u32 %v57, 4294901760
  %v545 = vsub.f32 %v57, %v544
  %546 = vmatprep.subr.mxu0 %v545
  %v547 = vand.u32 %v56, 4294901760
  %v548 = vsub.f32 %v56, %v547
  %549 = vmatpush1.msra.mxu0 %v548
  %v550 = vand.u32 %v55, 4294901760
  %v551 = vsub.f32 %v55, %v550
  %552 = vmatprep.subr.mxu0 %v551
  %v553 = vand.u32 %v54, 4294901760
  %v554 = vsub.f32 %v54, %v553
  %555 = vmatpush1.msra.mxu0 %v554
  %v556 = vand.u32 %v53, 4294901760
  %v557 = vsub.f32 %v53, %v556
  %558 = vmatprep.subr.mxu0 %v557
  %v559 = vand.u32 %v52, 4294901760
  %v560 = vsub.f32 %v52, %v559
  %561 = vmatpush1.msra.mxu0 %v560
  %v562 = vand.u32 %v51, 4294901760
  %v563 = vsub.f32 %v51, %v562
  %564 = vmatprep.subr.mxu0 %v563
  %v565 = vand.u32 %v50, 4294901760
  %v566 = vsub.f32 %v50, %v565
  %567 = vmatpush1.msra.mxu0 %v566
  %v568 = vand.u32 %v49, 4294901760
  %v569 = vsub.f32 %v49, %v568
  %570 = vmatprep.subr.mxu0 %v569
  %v571 = vand.u32 %v48, 4294901760
  %v572 = vsub.f32 %v48, %v571
  %573 = vmatpush1.msra.mxu0 %v572
  %v574 = vand.u32 %v47, 4294901760
  %v575 = vsub.f32 %v47, %v574
  %576 = vmatprep.subr.mxu0 %v575
  %v577 = vand.u32 %v46, 4294901760
  %v578 = vsub.f32 %v46, %v577
  %579 = vmatpush1.msra.mxu0 %v578
  %v580 = vand.u32 %v45, 4294901760
  %v581 = vsub.f32 %v45, %v580
  %582 = vmatprep.subr.mxu0 %v581
  %v583 = vand.u32 %v44, 4294901760
  %v584 = vsub.f32 %v44, %v583
  %585 = vmatpush1.msra.mxu0 %v584
  %v586 = vand.u32 %v43, 4294901760
  %v587 = vsub.f32 %v43, %v586
  %588 = vmatprep.subr.mxu0 %v587
  %v589 = vand.u32 %v42, 4294901760
  %v590 = vsub.f32 %v42, %v589
  %591 = vmatpush1.msra.mxu0 %v590
  %v592 = vand.u32 %v41, 4294901760
  %v593 = vsub.f32 %v41, %v592
  %594 = vmatprep.subr.mxu0 %v593
  %v595 = vand.u32 %v40, 4294901760
  %v596 = vsub.f32 %v40, %v595
  %597 = vmatpush1.msra.mxu0 %v596
  %v598 = vand.u32 %v39, 4294901760
  %v599 = vsub.f32 %v39, %v598
  %600 = vmatprep.subr.mxu0 %v599
  %v601 = vand.u32 %v38, 4294901760
  %v602 = vsub.f32 %v38, %v601
  %603 = vmatpush1.msra.mxu0 %v602
  %v604 = vand.u32 %v37, 4294901760
  %v605 = vsub.f32 %v37, %v604
  %606 = vmatprep.subr.mxu0 %v605
  %v607 = vand.u32 %v36, 4294901760
  %v608 = vsub.f32 %v36, %v607
  %609 = vmatpush1.msra.mxu0 %v608
  %v610 = vand.u32 %v35, 4294901760
  %v611 = vsub.f32 %v35, %v610
  %612 = vmatprep.subr.mxu0 %v611
  %v613 = vand.u32 %v34, 4294901760
  %v614 = vsub.f32 %v34, %v613
  %615 = vmatpush1.msra.mxu0 %v614
  %v616 = vand.u32 %v33, 4294901760
  %v617 = vsub.f32 %v33, %v616
  %618 = vmatprep.subr.mxu0 %v617
  %v619 = vand.u32 %v32, 4294901760
  %v620 = vsub.f32 %v32, %v619
  %621 = vmatpush1.msra.mxu0 %v620
  %v622 = vand.u32 %v31, 4294901760
  %v623 = vsub.f32 %v31, %v622
  %624 = vmatprep.subr.mxu0 %v623
  %v625 = vand.u32 %v30, 4294901760
  %v626 = vsub.f32 %v30, %v625
  %627 = vmatpush1.msra.mxu0 %v626
  %v628 = vand.u32 %v29, 4294901760
  %v629 = vsub.f32 %v29, %v628
  %630 = vmatprep.subr.mxu0 %v629
  %v631 = vand.u32 %v28, 4294901760
  %v632 = vsub.f32 %v28, %v631
  %633 = vmatpush1.msra.mxu0 %v632
  %634 = vmatprep.subr.mxu0 0.0
  %635 = vmatpush2.msra.mxu0 0.0
  %636 = vmatprep.subr.mxu0 0.0
  %637 = vmatpush2.msra.mxu0 0.0
  %638 = vmatprep.subr.mxu0 0.0
  %639 = vmatpush2.msra.mxu0 0.0
  %640 = vmatprep.subr.mxu0 0.0
  %641 = vmatpush2.msra.mxu0 0.0
  %642 = vmatprep.subr.mxu0 0.0
  %643 = vmatpush2.msra.mxu0 0.0
  %644 = vmatprep.subr.mxu0 0.0
  %645 = vmatpush2.msra.mxu0 0.0
  %646 = vmatprep.subr.mxu0 0.0
  %647 = vmatpush2.msra.mxu0 0.0
  %648 = vmatprep.subr.mxu0 0.0
  %649 = vmatpush2.msra.mxu0 0.0
  %650 = vmatprep.subr.mxu0 0.0
  %651 = vmatpush2.msra.mxu0 0.0
  %652 = vmatprep.subr.mxu0 0.0
  %653 = vmatpush2.msra.mxu0 0.0
  %654 = vmatprep.subr.mxu0 0.0
  %655 = vmatpush2.msra.mxu0 0.0
  %656 = vmatprep.subr.mxu0 0.0
  %657 = vmatpush2.msra.mxu0 0.0
  %658 = vmatprep.subr.mxu0 0.0
  %659 = vmatpush2.msra.mxu0 0.0
  %660 = vmatprep.subr.mxu0 0.0
  %661 = vmatpush2.msra.mxu0 0.0
  %662 = vmatprep.subr.mxu0 0.0
  %663 = vmatpush2.msra.mxu0 0.0
  %664 = vmatprep.subr.mxu0 0.0
  %665 = vmatpush2.msra.mxu0 0.0
  %666 = vmatprep.mubr.f32.mxu0 0.0
  %v667 = vand.u32 %v20, 4294901760
  %v668 = vsub.f32 %v20, %v667
  %669 = vmatmul.mubr.f32.gmra.mxu0 %v668
  %v670 = vpop.f32.mrf.mxu0
  %v671 = vadd.f32 %v485, %v670
  %v672 = vpop.f32.mrf.mxu0
  %v673 = vadd.f32 %v487, %v672
  %674 = vmatprep.mubr.f32.mxu0 0.0
  %v675 = vand.u32 %v21, 4294901760
  %v676 = vsub.f32 %v21, %v675
  %677 = vmatmul.mubr.f32.gmra.mxu0 %v676
  %v678 = vpop.f32.mrf.mxu0
  %v679 = vadd.f32 %v492, %v678
  %v680 = vpop.f32.mrf.mxu0
  %v681 = vadd.f32 %v494, %v680
  %682 = vmatprep.mubr.f32.mxu0 0.0
  %v683 = vand.u32 %v22, 4294901760
  %v684 = vsub.f32 %v22, %v683
  %685 = vmatmul.mubr.f32.gmra.mxu0 %v684
  %v686 = vpop.f32.mrf.mxu0
  %v687 = vadd.f32 %v499, %v686
  %v688 = vpop.f32.mrf.mxu0
  %v689 = vadd.f32 %v501, %v688
  %690 = vmatprep.mubr.f32.mxu0 0.0
  %v691 = vand.u32 %v23, 4294901760
  %v692 = vsub.f32 %v23, %v691
  %693 = vmatmul.mubr.f32.gmra.mxu0 %v692
  %v694 = vpop.f32.mrf.mxu0
  %v695 = vadd.f32 %v506, %v694
  %v696 = vpop.f32.mrf.mxu0
  %v697 = vadd.f32 %v508, %v696
  %698 = vmatprep.mubr.f32.mxu0 0.0
  %v699 = vand.u32 %v24, 4294901760
  %v700 = vsub.f32 %v24, %v699
  %701 = vmatmul.mubr.f32.gmra.mxu0 %v700
  %v702 = vpop.f32.mrf.mxu0
  %v703 = vadd.f32 %v513, %v702
  %v704 = vpop.f32.mrf.mxu0
  %v705 = vadd.f32 %v515, %v704
  %706 = vmatprep.mubr.f32.mxu0 0.0
  %v707 = vand.u32 %v25, 4294901760
  %v708 = vsub.f32 %v25, %v707
  %709 = vmatmul.mubr.f32.gmra.mxu0 %v708
  %v710 = vpop.f32.mrf.mxu0
  %v711 = vadd.f32 %v520, %v710
  %v712 = vpop.f32.mrf.mxu0
  %v713 = vadd.f32 %v522, %v712
  %714 = vmatprep.mubr.f32.mxu0 0.0
  %v715 = vand.u32 %v26, 4294901760
  %v716 = vsub.f32 %v26, %v715
  %717 = vmatmul.mubr.f32.gmra.mxu0 %v716
  %v718 = vpop.f32.mrf.mxu0
  %v719 = vadd.f32 %v527, %v718
  %v720 = vpop.f32.mrf.mxu0
  %v721 = vadd.f32 %v529, %v720
  %722 = vmatprep.mubr.f32.mxu0 0.0
  %v723 = vand.u32 %v27, 4294901760
  %v724 = vsub.f32 %v27, %v723
  %725 = vmatmul.mubr.f32.gmra.mxu0 %v724
  %v726 = vpop.f32.mrf.mxu0
  %v727 = vadd.f32 %v534, %v726
  %v728 = vpop.f32.mrf.mxu0
  %v729 = vadd.f32 %v536, %v728
  %730 = vdwg.mxu0
  %v731 = vand.u32 %v59, 4294901760
  %732 = vmatprep.subr.mxu0 %v731
  %v733 = vand.u32 %v58, 4294901760
  %734 = vmatpush1.msra.mxu0 %v733
  %v735 = vand.u32 %v57, 4294901760
  %736 = vmatprep.subr.mxu0 %v735
  %v737 = vand.u32 %v56, 4294901760
  %738 = vmatpush1.msra.mxu0 %v737
  %v739 = vand.u32 %v55, 4294901760
  %740 = vmatprep.subr.mxu0 %v739
  %v741 = vand.u32 %v54, 4294901760
  %742 = vmatpush1.msra.mxu0 %v741
  %v743 = vand.u32 %v53, 4294901760
  %744 = vmatprep.subr.mxu0 %v743
  %v745 = vand.u32 %v52, 4294901760
  %746 = vmatpush1.msra.mxu0 %v745
  %v747 = vand.u32 %v51, 4294901760
  %748 = vmatprep.subr.mxu0 %v747
  %v749 = vand.u32 %v50, 4294901760
  %750 = vmatpush1.msra.mxu0 %v749
  %v751 = vand.u32 %v49, 4294901760
  %752 = vmatprep.subr.mxu0 %v751
  %v753 = vand.u32 %v48, 4294901760
  %754 = vmatpush1.msra.mxu0 %v753
  %v755 = vand.u32 %v47, 4294901760
  %756 = vmatprep.subr.mxu0 %v755
  %v757 = vand.u32 %v46, 4294901760
  %758 = vmatpush1.msra.mxu0 %v757
  %v759 = vand.u32 %v45, 4294901760
  %760 = vmatprep.subr.mxu0 %v759
  %v761 = vand.u32 %v44, 4294901760
  %762 = vmatpush1.msra.mxu0 %v761
  %v763 = vand.u32 %v43, 4294901760
  %764 = vmatprep.subr.mxu0 %v763
  %v765 = vand.u32 %v42, 4294901760
  %766 = vmatpush1.msra.mxu0 %v765
  %v767 = vand.u32 %v41, 4294901760
  %768 = vmatprep.subr.mxu0 %v767
  %v769 = vand.u32 %v40, 4294901760
  %770 = vmatpush1.msra.mxu0 %v769
  %v771 = vand.u32 %v39, 4294901760
  %772 = vmatprep.subr.mxu0 %v771
  %v773 = vand.u32 %v38, 4294901760
  %774 = vmatpush1.msra.mxu0 %v773
  %v775 = vand.u32 %v37, 4294901760
  %776 = vmatprep.subr.mxu0 %v775
  %v777 = vand.u32 %v36, 4294901760
  %778 = vmatpush1.msra.mxu0 %v777
  %v779 = vand.u32 %v35, 4294901760
  %780 = vmatprep.subr.mxu0 %v779
  %v781 = vand.u32 %v34, 4294901760
  %782 = vmatpush1.msra.mxu0 %v781
  %v783 = vand.u32 %v33, 4294901760
  %784 = vmatprep.subr.mxu0 %v783
  %v785 = vand.u32 %v32, 4294901760
  %786 = vmatpush1.msra.mxu0 %v785
  %v787 = vand.u32 %v31, 4294901760
  %788 = vmatprep.subr.mxu0 %v787
  %v789 = vand.u32 %v30, 4294901760
  %790 = vmatpush1.msra.mxu0 %v789
  %v791 = vand.u32 %v29, 4294901760
  %792 = vmatprep.subr.mxu0 %v791
  %v793 = vand.u32 %v28, 4294901760
  %794 = vmatpush1.msra.mxu0 %v793
  %795 = vmatprep.subr.mxu0 0.0
  %796 = vmatpush2.msra.mxu0 0.0
  %797 = vmatprep.subr.mxu0 0.0
  %798 = vmatpush2.msra.mxu0 0.0
  %799 = vmatprep.subr.mxu0 0.0
  %800 = vmatpush2.msra.mxu0 0.0
  %801 = vmatprep.subr.mxu0 0.0
  %802 = vmatpush2.msra.mxu0 0.0
  %803 = vmatprep.subr.mxu0 0.0
  %804 = vmatpush2.msra.mxu0 0.0
  %805 = vmatprep.subr.mxu0 0.0
  %806 = vmatpush2.msra.mxu0 0.0
  %807 = vmatprep.subr.mxu0 0.0
  %808 = vmatpush2.msra.mxu0 0.0
  %809 = vmatprep.subr.mxu0 0.0
  %810 = vmatpush2.msra.mxu0 0.0
  %811 = vmatprep.subr.mxu0 0.0
  %812 = vmatpush2.msra.mxu0 0.0
  %813 = vmatprep.subr.mxu0 0.0
  %814 = vmatpush2.msra.mxu0 0.0
  %815 = vmatprep.subr.mxu0 0.0
  %816 = vmatpush2.msra.mxu0 0.0
  %817 = vmatprep.subr.mxu0 0.0
  %818 = vmatpush2.msra.mxu0 0.0
  %819 = vmatprep.subr.mxu0 0.0
  %820 = vmatpush2.msra.mxu0 0.0
  %821 = vmatprep.subr.mxu0 0.0
  %822 = vmatpush2.msra.mxu0 0.0
  %823 = vmatprep.subr.mxu0 0.0
  %824 = vmatpush2.msra.mxu0 0.0
  %825 = vmatprep.subr.mxu0 0.0
  %826 = vmatpush2.msra.mxu0 0.0
  %827 = vmatprep.mubr.f32.mxu0 0.0
  %v828 = vand.u32 %v20, 4294901760
  %v829 = vsub.f32 %v20, %v828
  %v830 = vand.u32 %v829, 4294901760
  %831 = vmatmul.mubr.f32.gmra.mxu0 %v830
  %v832 = vpop.f32.mrf.mxu0
  %v833 = vadd.f32 %v671, %v832
  %v834 = vpop.f32.mrf.mxu0
  %v835 = vadd.f32 %v673, %v834
  %836 = vmatprep.mubr.f32.mxu0 0.0
  %v837 = vand.u32 %v21, 4294901760
  %v838 = vsub.f32 %v21, %v837
  %v839 = vand.u32 %v838, 4294901760
  %840 = vmatmul.mubr.f32.gmra.mxu0 %v839
  %v841 = vpop.f32.mrf.mxu0
  %v842 = vadd.f32 %v679, %v841
  %v843 = vpop.f32.mrf.mxu0
  %v844 = vadd.f32 %v681, %v843
  %845 = vmatprep.mubr.f32.mxu0 0.0
  %v846 = vand.u32 %v22, 4294901760
  %v847 = vsub.f32 %v22, %v846
  %v848 = vand.u32 %v847, 4294901760
  %849 = vmatmul.mubr.f32.gmra.mxu0 %v848
  %v850 = vpop.f32.mrf.mxu0
  %v851 = vadd.f32 %v687, %v850
  %v852 = vpop.f32.mrf.mxu0
  %v853 = vadd.f32 %v689, %v852
  %854 = vmatprep.mubr.f32.mxu0 0.0
  %v855 = vand.u32 %v23, 4294901760
  %v856 = vsub.f32 %v23, %v855
  %v857 = vand.u32 %v856, 4294901760
  %858 = vmatmul.mubr.f32.gmra.mxu0 %v857
  %v859 = vpop.f32.mrf.mxu0
  %v860 = vadd.f32 %v695, %v859
  %v861 = vpop.f32.mrf.mxu0
  %v862 = vadd.f32 %v697, %v861
  %863 = vmatprep.mubr.f32.mxu0 0.0
  %v864 = vand.u32 %v24, 4294901760
  %v865 = vsub.f32 %v24, %v864
  %v866 = vand.u32 %v865, 4294901760
  %867 = vmatmul.mubr.f32.gmra.mxu0 %v866
  %v868 = vpop.f32.mrf.mxu0
  %v869 = vadd.f32 %v703, %v868
  %v870 = vpop.f32.mrf.mxu0
  %v871 = vadd.f32 %v705, %v870
  %872 = vmatprep.mubr.f32.mxu0 0.0
  %v873 = vand.u32 %v25, 4294901760
  %v874 = vsub.f32 %v25, %v873
  %v875 = vand.u32 %v874, 4294901760
  %876 = vmatmul.mubr.f32.gmra.mxu0 %v875
  %v877 = vpop.f32.mrf.mxu0
  %v878 = vadd.f32 %v711, %v877
  %v879 = vpop.f32.mrf.mxu0
  %v880 = vadd.f32 %v713, %v879
  %881 = vmatprep.mubr.f32.mxu0 0.0
  %v882 = vand.u32 %v26, 4294901760
  %v883 = vsub.f32 %v26, %v882
  %v884 = vand.u32 %v883, 4294901760
  %885 = vmatmul.mubr.f32.gmra.mxu0 %v884
  %v886 = vpop.f32.mrf.mxu0
  %v887 = vadd.f32 %v719, %v886
  %v888 = vpop.f32.mrf.mxu0
  %v889 = vadd.f32 %v721, %v888
  %890 = vmatprep.mubr.f32.mxu0 0.0
  %v891 = vand.u32 %v27, 4294901760
  %v892 = vsub.f32 %v27, %v891
  %v893 = vand.u32 %v892, 4294901760
  %894 = vmatmul.mubr.f32.gmra.mxu0 %v893
  %v895 = vpop.f32.mrf.mxu0
  %v896 = vadd.f32 %v727, %v895
  %v897 = vpop.f32.mrf.mxu0
  %v898 = vadd.f32 %v729, %v897
  %899 = vdwg.mxu0
  %v900 = vand.u32 %v59, 4294901760
  %v901 = vsub.f32 %v59, %v900
  %v902 = vand.u32 %v901, 4294901760
  %903 = vmatprep.subr.mxu0 %v902
  %v904 = vand.u32 %v58, 4294901760
  %v905 = vsub.f32 %v58, %v904
  %v906 = vand.u32 %v905, 4294901760
  %907 = vmatpush1.msra.mxu0 %v906
  %v908 = vand.u32 %v57, 4294901760
  %v909 = vsub.f32 %v57, %v908
  %v910 = vand.u32 %v909, 4294901760
  %911 = vmatprep.subr.mxu0 %v910
  %v912 = vand.u32 %v56, 4294901760
  %v913 = vsub.f32 %v56, %v912
  %v914 = vand.u32 %v913, 4294901760
  %915 = vmatpush1.msra.mxu0 %v914
  %v916 = vand.u32 %v55, 4294901760
  %v917 = vsub.f32 %v55, %v916
  %v918 = vand.u32 %v917, 4294901760
  %919 = vmatprep.subr.mxu0 %v918
  %v920 = vand.u32 %v54, 4294901760
  %v921 = vsub.f32 %v54, %v920
  %v922 = vand.u32 %v921, 4294901760
  %923 = vmatpush1.msra.mxu0 %v922
  %v924 = vand.u32 %v53, 4294901760
  %v925 = vsub.f32 %v53, %v924
  %v926 = vand.u32 %v925, 4294901760
  %927 = vmatprep.subr.mxu0 %v926
  %v928 = vand.u32 %v52, 4294901760
  %v929 = vsub.f32 %v52, %v928
  %v930 = vand.u32 %v929, 4294901760
  %931 = vmatpush1.msra.mxu0 %v930
  %v932 = vand.u32 %v51, 4294901760
  %v933 = vsub.f32 %v51, %v932
  %v934 = vand.u32 %v933, 4294901760
  %935 = vmatprep.subr.mxu0 %v934
  %v936 = vand.u32 %v50, 4294901760
  %v937 = vsub.f32 %v50, %v936
  %v938 = vand.u32 %v937, 4294901760
  %939 = vmatpush1.msra.mxu0 %v938
  %v940 = vand.u32 %v49, 4294901760
  %v941 = vsub.f32 %v49, %v940
  %v942 = vand.u32 %v941, 4294901760
  %943 = vmatprep.subr.mxu0 %v942
  %v944 = vand.u32 %v48, 4294901760
  %v945 = vsub.f32 %v48, %v944
  %v946 = vand.u32 %v945, 4294901760
  %947 = vmatpush1.msra.mxu0 %v946
  %v948 = vand.u32 %v47, 4294901760
  %v949 = vsub.f32 %v47, %v948
  %v950 = vand.u32 %v949, 4294901760
  %951 = vmatprep.subr.mxu0 %v950
  %v952 = vand.u32 %v46, 4294901760
  %v953 = vsub.f32 %v46, %v952
  %v954 = vand.u32 %v953, 4294901760
  %955 = vmatpush1.msra.mxu0 %v954
  %v956 = vand.u32 %v45, 4294901760
  %v957 = vsub.f32 %v45, %v956
  %v958 = vand.u32 %v957, 4294901760
  %959 = vmatprep.subr.mxu0 %v958
  %v960 = vand.u32 %v44, 4294901760
  %v961 = vsub.f32 %v44, %v960
  %v962 = vand.u32 %v961, 4294901760
  %963 = vmatpush1.msra.mxu0 %v962
  %v964 = vand.u32 %v43, 4294901760
  %v965 = vsub.f32 %v43, %v964
  %v966 = vand.u32 %v965, 4294901760
  %967 = vmatprep.subr.mxu0 %v966
  %v968 = vand.u32 %v42, 4294901760
  %v969 = vsub.f32 %v42, %v968
  %v970 = vand.u32 %v969, 4294901760
  %971 = vmatpush1.msra.mxu0 %v970
  %v972 = vand.u32 %v41, 4294901760
  %v973 = vsub.f32 %v41, %v972
  %v974 = vand.u32 %v973, 4294901760
  %975 = vmatprep.subr.mxu0 %v974
  %v976 = vand.u32 %v40, 4294901760
  %v977 = vsub.f32 %v40, %v976
  %v978 = vand.u32 %v977, 4294901760
  %979 = vmatpush1.msra.mxu0 %v978
  %v980 = vand.u32 %v39, 4294901760
  %v981 = vsub.f32 %v39, %v980
  %v982 = vand.u32 %v981, 4294901760
  %983 = vmatprep.subr.mxu0 %v982
  %v984 = vand.u32 %v38, 4294901760
  %v985 = vsub.f32 %v38, %v984
  %v986 = vand.u32 %v985, 4294901760
  %987 = vmatpush1.msra.mxu0 %v986
  %v988 = vand.u32 %v37, 4294901760
  %v989 = vsub.f32 %v37, %v988
  %v990 = vand.u32 %v989, 4294901760
  %991 = vmatprep.subr.mxu0 %v990
  %v992 = vand.u32 %v36, 4294901760
  %v993 = vsub.f32 %v36, %v992
  %v994 = vand.u32 %v993, 4294901760
  %995 = vmatpush1.msra.mxu0 %v994
  %v996 = vand.u32 %v35, 4294901760
  %v997 = vsub.f32 %v35, %v996
  %v998 = vand.u32 %v997, 4294901760
  %999 = vmatprep.subr.mxu0 %v998
  %v1000 = vand.u32 %v34, 4294901760
  %v1001 = vsub.f32 %v34, %v1000
  %v1002 = vand.u32 %v1001, 4294901760
  %1003 = vmatpush1.msra.mxu0 %v1002
  %v1004 = vand.u32 %v33, 4294901760
  %v1005 = vsub.f32 %v33, %v1004
  %v1006 = vand.u32 %v1005, 4294901760
  %1007 = vmatprep.subr.mxu0 %v1006
  %v1008 = vand.u32 %v32, 4294901760
  %v1009 = vsub.f32 %v32, %v1008
  %v1010 = vand.u32 %v1009, 4294901760
  %1011 = vmatpush1.msra.mxu0 %v1010
  %v1012 = vand.u32 %v31, 4294901760
  %v1013 = vsub.f32 %v31, %v1012
  %v1014 = vand.u32 %v1013, 4294901760
  %1015 = vmatprep.subr.mxu0 %v1014
  %v1016 = vand.u32 %v30, 4294901760
  %v1017 = vsub.f32 %v30, %v1016
  %v1018 = vand.u32 %v1017, 4294901760
  %1019 = vmatpush1.msra.mxu0 %v1018
  %v1020 = vand.u32 %v29, 4294901760
  %v1021 = vsub.f32 %v29, %v1020
  %v1022 = vand.u32 %v1021, 4294901760
  %1023 = vmatprep.subr.mxu0 %v1022
  %v1024 = vand.u32 %v28, 4294901760
  %v1025 = vsub.f32 %v28, %v1024
  %v1026 = vand.u32 %v1025, 4294901760
  %1027 = vmatpush1.msra.mxu0 %v1026
  %1028 = vmatprep.subr.mxu0 0.0
  %1029 = vmatpush2.msra.mxu0 0.0
  %1030 = vmatprep.subr.mxu0 0.0
  %1031 = vmatpush2.msra.mxu0 0.0
  %1032 = vmatprep.subr.mxu0 0.0
  %1033 = vmatpush2.msra.mxu0 0.0
  %1034 = vmatprep.subr.mxu0 0.0
  %1035 = vmatpush2.msra.mxu0 0.0
  %1036 = vmatprep.subr.mxu0 0.0
  %1037 = vmatpush2.msra.mxu0 0.0
  %1038 = vmatprep.subr.mxu0 0.0
  %1039 = vmatpush2.msra.mxu0 0.0
  %1040 = vmatprep.subr.mxu0 0.0
  %1041 = vmatpush2.msra.mxu0 0.0
  %1042 = vmatprep.subr.mxu0 0.0
  %1043 = vmatpush2.msra.mxu0 0.0
  %1044 = vmatprep.subr.mxu0 0.0
  %1045 = vmatpush2.msra.mxu0 0.0
  %1046 = vmatprep.subr.mxu0 0.0
  %1047 = vmatpush2.msra.mxu0 0.0
  %1048 = vmatprep.subr.mxu0 0.0
  %1049 = vmatpush2.msra.mxu0 0.0
  %1050 = vmatprep.subr.mxu0 0.0
  %1051 = vmatpush2.msra.mxu0 0.0
  %1052 = vmatprep.subr.mxu0 0.0
  %1053 = vmatpush2.msra.mxu0 0.0
  %1054 = vmatprep.subr.mxu0 0.0
  %1055 = vmatpush2.msra.mxu0 0.0
  %1056 = vmatprep.subr.mxu0 0.0
  %1057 = vmatpush2.msra.mxu0 0.0
  %1058 = vmatprep.subr.mxu0 0.0
  %1059 = vmatpush2.msra.mxu0 0.0
  %1060 = vmatprep.mubr.f32.mxu0 0.0
  %v1061 = vand.u32 %v20, 4294901760
  %1062 = vmatmul.mubr.f32.gmra.mxu0 %v1061
  %v1063 = vpop.f32.mrf.mxu0
  %v1064 = vadd.f32 %v833, %v1063
  %v1065 = vpop.f32.mrf.mxu0
  %v1066 = vadd.f32 %v835, %v1065
  %1067 = vmatprep.mubr.f32.mxu0 0.0
  %v1068 = vand.u32 %v21, 4294901760
  %1069 = vmatmul.mubr.f32.gmra.mxu0 %v1068
  %v1070 = vpop.f32.mrf.mxu0
  %v1071 = vadd.f32 %v842, %v1070
  %v1072 = vpop.f32.mrf.mxu0
  %v1073 = vadd.f32 %v844, %v1072
  %1074 = vmatprep.mubr.f32.mxu0 0.0
  %v1075 = vand.u32 %v22, 4294901760
  %1076 = vmatmul.mubr.f32.gmra.mxu0 %v1075
  %v1077 = vpop.f32.mrf.mxu0
  %v1078 = vadd.f32 %v851, %v1077
  %v1079 = vpop.f32.mrf.mxu0
  %v1080 = vadd.f32 %v853, %v1079
  %1081 = vmatprep.mubr.f32.mxu0 0.0
  %v1082 = vand.u32 %v23, 4294901760
  %1083 = vmatmul.mubr.f32.gmra.mxu0 %v1082
  %v1084 = vpop.f32.mrf.mxu0
  %v1085 = vadd.f32 %v860, %v1084
  %v1086 = vpop.f32.mrf.mxu0
  %v1087 = vadd.f32 %v862, %v1086
  %1088 = vmatprep.mubr.f32.mxu0 0.0
  %v1089 = vand.u32 %v24, 4294901760
  %1090 = vmatmul.mubr.f32.gmra.mxu0 %v1089
  %v1091 = vpop.f32.mrf.mxu0
  %v1092 = vadd.f32 %v869, %v1091
  %v1093 = vpop.f32.mrf.mxu0
  %v1094 = vadd.f32 %v871, %v1093
  %1095 = vmatprep.mubr.f32.mxu0 0.0
  %v1096 = vand.u32 %v25, 4294901760
  %1097 = vmatmul.mubr.f32.gmra.mxu0 %v1096
  %v1098 = vpop.f32.mrf.mxu0
  %v1099 = vadd.f32 %v878, %v1098
  %v1100 = vpop.f32.mrf.mxu0
  %v1101 = vadd.f32 %v880, %v1100
  %1102 = vmatprep.mubr.f32.mxu0 0.0
  %v1103 = vand.u32 %v26, 4294901760
  %1104 = vmatmul.mubr.f32.gmra.mxu0 %v1103
  %v1105 = vpop.f32.mrf.mxu0
  %v1106 = vadd.f32 %v887, %v1105
  %v1107 = vpop.f32.mrf.mxu0
  %v1108 = vadd.f32 %v889, %v1107
  %1109 = vmatprep.mubr.f32.mxu0 0.0
  %v1110 = vand.u32 %v27, 4294901760
  %1111 = vmatmul.mubr.f32.gmra.mxu0 %v1110
  %v1112 = vpop.f32.mrf.mxu0
  %v1113 = vadd.f32 %v896, %v1112
  %v1114 = vpop.f32.mrf.mxu0
  %v1115 = vadd.f32 %v898, %v1114
  %1116 = vdwg.mxu0
  %v1117 = vand.u32 %v59, 4294901760
  %1118 = vmatprep.subr.mxu0 %v1117
  %v1119 = vand.u32 %v58, 4294901760
  %1120 = vmatpush1.msra.mxu0 %v1119
  %v1121 = vand.u32 %v57, 4294901760
  %1122 = vmatprep.subr.mxu0 %v1121
  %v1123 = vand.u32 %v56, 4294901760
  %1124 = vmatpush1.msra.mxu0 %v1123
  %v1125 = vand.u32 %v55, 4294901760
  %1126 = vmatprep.subr.mxu0 %v1125
  %v1127 = vand.u32 %v54, 4294901760
  %1128 = vmatpush1.msra.mxu0 %v1127
  %v1129 = vand.u32 %v53, 4294901760
  %1130 = vmatprep.subr.mxu0 %v1129
  %v1131 = vand.u32 %v52, 4294901760
  %1132 = vmatpush1.msra.mxu0 %v1131
  %v1133 = vand.u32 %v51, 4294901760
  %1134 = vmatprep.subr.mxu0 %v1133
  %v1135 = vand.u32 %v50, 4294901760
  %1136 = vmatpush1.msra.mxu0 %v1135
  %v1137 = vand.u32 %v49, 4294901760
  %1138 = vmatprep.subr.mxu0 %v1137
  %v1139 = vand.u32 %v48, 4294901760
  %1140 = vmatpush1.msra.mxu0 %v1139
  %v1141 = vand.u32 %v47, 4294901760
  %1142 = vmatprep.subr.mxu0 %v1141
  %v1143 = vand.u32 %v46, 4294901760
  %1144 = vmatpush1.msra.mxu0 %v1143
  %v1145 = vand.u32 %v45, 4294901760
  %1146 = vmatprep.subr.mxu0 %v1145
  %v1147 = vand.u32 %v44, 4294901760
  %1148 = vmatpush1.msra.mxu0 %v1147
  %v1149 = vand.u32 %v43, 4294901760
  %1150 = vmatprep.subr.mxu0 %v1149
  %v1151 = vand.u32 %v42, 4294901760
  %1152 = vmatpush1.msra.mxu0 %v1151
  %v1153 = vand.u32 %v41, 4294901760
  %1154 = vmatprep.subr.mxu0 %v1153
  %v1155 = vand.u32 %v40, 4294901760
  %1156 = vmatpush1.msra.mxu0 %v1155
  %v1157 = vand.u32 %v39, 4294901760
  %1158 = vmatprep.subr.mxu0 %v1157
  %v1159 = vand.u32 %v38, 4294901760
  %1160 = vmatpush1.msra.mxu0 %v1159
  %v1161 = vand.u32 %v37, 4294901760
  %1162 = vmatprep.subr.mxu0 %v1161
  %v1163 = vand.u32 %v36, 4294901760
  %1164 = vmatpush1.msra.mxu0 %v1163
  %v1165 = vand.u32 %v35, 4294901760
  %1166 = vmatprep.subr.mxu0 %v1165
  %v1167 = vand.u32 %v34, 4294901760
  %1168 = vmatpush1.msra.mxu0 %v1167
  %v1169 = vand.u32 %v33, 4294901760
  %1170 = vmatprep.subr.mxu0 %v1169
  %v1171 = vand.u32 %v32, 4294901760
  %1172 = vmatpush1.msra.mxu0 %v1171
  %v1173 = vand.u32 %v31, 4294901760
  %1174 = vmatprep.subr.mxu0 %v1173
  %v1175 = vand.u32 %v30, 4294901760
  %1176 = vmatpush1.msra.mxu0 %v1175
  %v1177 = vand.u32 %v29, 4294901760
  %1178 = vmatprep.subr.mxu0 %v1177
  %v1179 = vand.u32 %v28, 4294901760
  %1180 = vmatpush1.msra.mxu0 %v1179
  %1181 = vmatprep.subr.mxu0 0.0
  %1182 = vmatpush2.msra.mxu0 0.0
  %1183 = vmatprep.subr.mxu0 0.0
  %1184 = vmatpush2.msra.mxu0 0.0
  %1185 = vmatprep.subr.mxu0 0.0
  %1186 = vmatpush2.msra.mxu0 0.0
  %1187 = vmatprep.subr.mxu0 0.0
  %1188 = vmatpush2.msra.mxu0 0.0
  %1189 = vmatprep.subr.mxu0 0.0
  %1190 = vmatpush2.msra.mxu0 0.0
  %1191 = vmatprep.subr.mxu0 0.0
  %1192 = vmatpush2.msra.mxu0 0.0
  %1193 = vmatprep.subr.mxu0 0.0
  %1194 = vmatpush2.msra.mxu0 0.0
  %1195 = vmatprep.subr.mxu0 0.0
  %1196 = vmatpush2.msra.mxu0 0.0
  %1197 = vmatprep.subr.mxu0 0.0
  %1198 = vmatpush2.msra.mxu0 0.0
  %1199 = vmatprep.subr.mxu0 0.0
  %1200 = vmatpush2.msra.mxu0 0.0
  %1201 = vmatprep.subr.mxu0 0.0
  %1202 = vmatpush2.msra.mxu0 0.0
  %1203 = vmatprep.subr.mxu0 0.0
  %1204 = vmatpush2.msra.mxu0 0.0
  %1205 = vmatprep.subr.mxu0 0.0
  %1206 = vmatpush2.msra.mxu0 0.0
  %1207 = vmatprep.subr.mxu0 0.0
  %1208 = vmatpush2.msra.mxu0 0.0
  %1209 = vmatprep.subr.mxu0 0.0
  %1210 = vmatpush2.msra.mxu0 0.0
  %1211 = vmatprep.subr.mxu0 0.0
  %1212 = vmatpush2.msra.mxu0 0.0
  %1213 = vmatprep.mubr.f32.mxu0 0.0
  %v1214 = vand.u32 %v20, 4294901760
  %1215 = vmatmul.mubr.f32.gmra.mxu0 %v1214
  %v1216 = vpop.f32.mrf.mxu0
  %v1217 = vadd.f32 %v1064, %v1216
  %v1218 = vpop.f32.mrf.mxu0
  %v1219 = vadd.f32 %v1066, %v1218
  %1220 = vmatprep.mubr.f32.mxu0 0.0
  %v1221 = vand.u32 %v21, 4294901760
  %1222 = vmatmul.mubr.f32.gmra.mxu0 %v1221
  %v1223 = vpop.f32.mrf.mxu0
  %v1224 = vadd.f32 %v1071, %v1223
  %v1225 = vpop.f32.mrf.mxu0
  %v1226 = vadd.f32 %v1073, %v1225
  %1227 = vmatprep.mubr.f32.mxu0 0.0
  %v1228 = vand.u32 %v22, 4294901760
  %1229 = vmatmul.mubr.f32.gmra.mxu0 %v1228
  %v1230 = vpop.f32.mrf.mxu0
  %v1231 = vadd.f32 %v1078, %v1230
  %v1232 = vpop.f32.mrf.mxu0
  %v1233 = vadd.f32 %v1080, %v1232
  %1234 = vmatprep.mubr.f32.mxu0 0.0
  %v1235 = vand.u32 %v23, 4294901760
  %1236 = vmatmul.mubr.f32.gmra.mxu0 %v1235
  %v1237 = vpop.f32.mrf.mxu0
  %v1238 = vadd.f32 %v1085, %v1237
  %v1239 = vpop.f32.mrf.mxu0
  %v1240 = vadd.f32 %v1087, %v1239
  %1241 = vmatprep.mubr.f32.mxu0 0.0
  %v1242 = vand.u32 %v24, 4294901760
  %1243 = vmatmul.mubr.f32.gmra.mxu0 %v1242
  %v1244 = vpop.f32.mrf.mxu0
  %v1245 = vadd.f32 %v1092, %v1244
  %v1246 = vpop.f32.mrf.mxu0
  %v1247 = vadd.f32 %v1094, %v1246
  %1248 = vmatprep.mubr.f32.mxu0 0.0
  %v1249 = vand.u32 %v25, 4294901760
  %1250 = vmatmul.mubr.f32.gmra.mxu0 %v1249
  %v1251 = vpop.f32.mrf.mxu0
  %v1252 = vadd.f32 %v1099, %v1251
  %v1253 = vpop.f32.mrf.mxu0
  %v1254 = vadd.f32 %v1101, %v1253
  %1255 = vmatprep.mubr.f32.mxu0 0.0
  %v1256 = vand.u32 %v26, 4294901760
  %1257 = vmatmul.mubr.f32.gmra.mxu0 %v1256
  %v1258 = vpop.f32.mrf.mxu0
  %v1259 = vadd.f32 %v1106, %v1258
  %v1260 = vpop.f32.mrf.mxu0
  %v1261 = vadd.f32 %v1108, %v1260
  %1262 = vmatprep.mubr.f32.mxu0 0.0
  %v1263 = vand.u32 %v27, 4294901760
  %1264 = vmatmul.mubr.f32.gmra.mxu0 %v1263
  %v1265 = vpop.f32.mrf.mxu0
  %v1266 = vadd.f32 %v1113, %v1265
  %v1267 = vpop.f32.mrf.mxu0
  %v1268 = vadd.f32 %v1115, %v1267
  %1269 = vdwg.mxu0
  %v1270 = vmax.f32 %v1217, 0.0
  %v1271 = vmax.f32 %v1219, 0.0
  %v1272 = vmax.f32 %v1224, 0.0
  %v1273 = vmax.f32 %v1226, 0.0
  %v1274 = vmax.f32 %v1231, 0.0
  %v1275 = vmax.f32 %v1233, 0.0
  %v1276 = vmax.f32 %v1238, 0.0
  %v1277 = vmax.f32 %v1240, 0.0
  %v1278 = vmax.f32 %v1245, 0.0
  %v1279 = vmax.f32 %v1247, 0.0
  %v1280 = vmax.f32 %v1252, 0.0
  %v1281 = vmax.f32 %v1254, 0.0
  %v1282 = vmax.f32 %v1259, 0.0
  %v1283 = vmax.f32 %v1261, 0.0
  %v1284 = vmax.f32 %v1266, 0.0
  %v1285 = vmax.f32 %v1268, 0.0
  %v1286 = vld [vmem:[%s3] sm:$0xff]
  %v1287 = vld [vmem:[%s3 + $0x8] sm:$0xff]
  %v1288 = vld [vmem:[%s3 + $0x10] sm:$0xff]
  %v1289 = vld [vmem:[%s3 + $0x18] sm:$0xff]
  %v1290 = vld [vmem:[%s3 + $0x20] sm:$0xff]
  %v1291 = vld [vmem:[%s3 + $0x28] sm:$0xff]
  %v1292 = vld [vmem:[%s3 + $0x30] sm:$0xff]
  %v1293 = vld [vmem:[%s3 + $0x38] sm:$0xff]
  %v1294 = vld [vmem:[%s3 + $0x40] sm:$0xff]
  %v1295 = vld [vmem:[%s3 + $0x48] sm:$0xff]
  %v1296 = vld [vmem:[%s3 + $0x50] sm:$0xff]
  %v1297 = vld [vmem:[%s3 + $0x58] sm:$0xff]
  %v1298 = vld [vmem:[%s3 + $0x60] sm:$0xff]
  %v1299 = vld [vmem:[%s3 + $0x68] sm:$0xff]
  %v1300 = vld [vmem:[%s3 + $0x70] sm:$0xff]
  %v1301 = vld [vmem:[%s3 + $0x78] sm:$0xff]
  %v1302 = vld [vmem:[%s3 + $0x80] sm:$0xff]
  %v1303 = vld [vmem:[%s3 + $0x88] sm:$0xff]
  %v1304 = vld [vmem:[%s3 + $0x90] sm:$0xff]
  %v1305 = vld [vmem:[%s3 + $0x98] sm:$0xff]
  %v1306 = vld [vmem:[%s3 + $0xa0] sm:$0xff]
  %v1307 = vld [vmem:[%s3 + $0xa8] sm:$0xff]
  %v1308 = vld [vmem:[%s3 + $0xb0] sm:$0xff]
  %v1309 = vld [vmem:[%s3 + $0xb8] sm:$0xff]
  %v1310 = vld [vmem:[%s4] sm:$0x1]
  %v1312 = vlaneseq
  %v1313 = vshrl.u32 %v1312, 7
  %v1314 = vsub.s32 0, %v1313
  %v1315 = vrot.slane %v1310, %v1314
  %vm1317 = vcmask 523264
  %v1319 = vsel %vm1317, %v1271, 0
  %v1322 = vsel %vm1317, %v1273, 0
  %v1325 = vsel %vm1317, %v1275, 0
  %v1328 = vsel %vm1317, %v1277, 0
  %v1331 = vsel %vm1317, %v1279, 0
  %v1334 = vsel %vm1317, %v1281, 0
  %v1337 = vsel %vm1317, %v1283, 0
  %v1340 = vsel %vm1317, %v1285, 0
  %1342 = vmatprep.subr.mxu0 0.0
  %v1343 = vand.u32 %v1301, 4294901760
  %1344 = vmatpush1.msra.mxu0 %v1343
  %1345 = vmatprep.subr.mxu0 0.0
  %v1346 = vand.u32 %v1300, 4294901760
  %1347 = vmatpush1.msra.mxu0 %v1346
  %1348 = vmatprep.subr.mxu0 0.0
  %v1349 = vand.u32 %v1299, 4294901760
  %1350 = vmatpush1.msra.mxu0 %v1349
  %1351 = vmatprep.subr.mxu0 0.0
  %v1352 = vand.u32 %v1298, 4294901760
  %1353 = vmatpush1.msra.mxu0 %v1352
  %1354 = vmatprep.subr.mxu0 0.0
  %v1355 = vand.u32 %v1297, 4294901760
  %1356 = vmatpush1.msra.mxu0 %v1355
  %1357 = vmatprep.subr.mxu0 0.0
  %v1358 = vand.u32 %v1296, 4294901760
  %1359 = vmatpush1.msra.mxu0 %v1358
  %1360 = vmatprep.subr.mxu0 0.0
  %v1361 = vand.u32 %v1295, 4294901760
  %1362 = vmatpush1.msra.mxu0 %v1361
  %1363 = vmatprep.subr.mxu0 0.0
  %v1364 = vand.u32 %v1294, 4294901760
  %1365 = vmatpush1.msra.mxu0 %v1364
  %1366 = vmatprep.subr.mxu0 0.0
  %v1367 = vand.u32 %v1293, 4294901760
  %1368 = vmatpush1.msra.mxu0 %v1367
  %1369 = vmatprep.subr.mxu0 0.0
  %v1370 = vand.u32 %v1292, 4294901760
  %1371 = vmatpush1.msra.mxu0 %v1370
  %1372 = vmatprep.subr.mxu0 0.0
  %v1373 = vand.u32 %v1291, 4294901760
  %1374 = vmatpush1.msra.mxu0 %v1373
  %1375 = vmatprep.subr.mxu0 0.0
  %v1376 = vand.u32 %v1290, 4294901760
  %1377 = vmatpush1.msra.mxu0 %v1376
  %1378 = vmatprep.subr.mxu0 0.0
  %v1379 = vand.u32 %v1289, 4294901760
  %1380 = vmatpush1.msra.mxu0 %v1379
  %1381 = vmatprep.subr.mxu0 0.0
  %v1382 = vand.u32 %v1288, 4294901760
  %1383 = vmatpush1.msra.mxu0 %v1382
  %1384 = vmatprep.subr.mxu0 0.0
  %v1385 = vand.u32 %v1287, 4294901760
  %1386 = vmatpush1.msra.mxu0 %v1385
  %1387 = vmatprep.subr.mxu0 0.0
  %v1388 = vand.u32 %v1286, 4294901760
  %1389 = vmatpush1.msra.mxu0 %v1388
  %1390 = vmatprep.subr.mxu0 0.0
  %1391 = vmatpush2.msra.mxu0 0.0
  %1392 = vmatprep.subr.mxu0 0.0
  %1393 = vmatpush2.msra.mxu0 0.0
  %1394 = vmatprep.subr.mxu0 0.0
  %1395 = vmatpush2.msra.mxu0 0.0
  %1396 = vmatprep.subr.mxu0 0.0
  %1397 = vmatpush2.msra.mxu0 0.0
  %1398 = vmatprep.subr.mxu0 0.0
  %1399 = vmatpush2.msra.mxu0 0.0
  %1400 = vmatprep.subr.mxu0 0.0
  %1401 = vmatpush2.msra.mxu0 0.0
  %1402 = vmatprep.subr.mxu0 0.0
  %1403 = vmatpush2.msra.mxu0 0.0
  %1404 = vmatprep.subr.mxu0 0.0
  %1405 = vmatpush2.msra.mxu0 0.0
  %1406 = vmatprep.subr.mxu0 0.0
  %v1407 = vand.u32 %v1309, 4294901760
  %1408 = vmatpush2.msra.mxu0 %v1407
  %1409 = vmatprep.subr.mxu0 0.0
  %v1410 = vand.u32 %v1308, 4294901760
  %1411 = vmatpush2.msra.mxu0 %v1410
  %1412 = vmatprep.subr.mxu0 0.0
  %v1413 = vand.u32 %v1307, 4294901760
  %1414 = vmatpush2.msra.mxu0 %v1413
  %1415 = vmatprep.subr.mxu0 0.0
  %v1416 = vand.u32 %v1306, 4294901760
  %1417 = vmatpush2.msra.mxu0 %v1416
  %1418 = vmatprep.subr.mxu0 0.0
  %v1419 = vand.u32 %v1305, 4294901760
  %1420 = vmatpush2.msra.mxu0 %v1419
  %1421 = vmatprep.subr.mxu0 0.0
  %v1422 = vand.u32 %v1304, 4294901760
  %1423 = vmatpush2.msra.mxu0 %v1422
  %1424 = vmatprep.subr.mxu0 0.0
  %v1425 = vand.u32 %v1303, 4294901760
  %1426 = vmatpush2.msra.mxu0 %v1425
  %1427 = vmatprep.subr.mxu0 0.0
  %v1428 = vand.u32 %v1302, 4294901760
  %1429 = vmatpush2.msra.mxu0 %v1428
  %v1430 = vand.u32 %v1319, 4294901760
  %v1431 = vsub.f32 %v1319, %v1430
  %v1432 = vand.u32 %v1431, 4294901760
  %v1433 = vsub.f32 %v1431, %v1432
  %v1434 = vand.u32 %v1433, 4294901760
  %1435 = vmatprep.mubr.f32.mxu0 %v1434
  %v1436 = vand.u32 %v1270, 4294901760
  %v1437 = vsub.f32 %v1270, %v1436
  %v1438 = vand.u32 %v1437, 4294901760
  %v1439 = vsub.f32 %v1437, %v1438
  %v1440 = vand.u32 %v1439, 4294901760
  %1441 = vmatmul.mubr.f32.gmra.mxu0 %v1440
  %v1442 = vpop.f32.mrf.mxu0
  %v1443 = vadd.f32 %v1315, %v1442
  %v1444 = vpop.f32.mrf.mxu0
  %v1445 = vand.u32 %v1322, 4294901760
  %v1446 = vsub.f32 %v1322, %v1445
  %v1447 = vand.u32 %v1446, 4294901760
  %v1448 = vsub.f32 %v1446, %v1447
  %v1449 = vand.u32 %v1448, 4294901760
  %1450 = vmatprep.mubr.f32.mxu0 %v1449
  %v1451 = vand.u32 %v1272, 4294901760
  %v1452 = vsub.f32 %v1272, %v1451
  %v1453 = vand.u32 %v1452, 4294901760
  %v1454 = vsub.f32 %v1452, %v1453
  %v1455 = vand.u32 %v1454, 4294901760
  %1456 = vmatmul.mubr.f32.gmra.mxu0 %v1455
  %v1457 = vpop.f32.mrf.mxu0
  %v1458 = vadd.f32 %v1315, %v1457
  %v1459 = vpop.f32.mrf.mxu0
  %v1460 = vand.u32 %v1325, 4294901760
  %v1461 = vsub.f32 %v1325, %v1460
  %v1462 = vand.u32 %v1461, 4294901760
  %v1463 = vsub.f32 %v1461, %v1462
  %v1464 = vand.u32 %v1463, 4294901760
  %1465 = vmatprep.mubr.f32.mxu0 %v1464
  %v1466 = vand.u32 %v1274, 4294901760
  %v1467 = vsub.f32 %v1274, %v1466
  %v1468 = vand.u32 %v1467, 4294901760
  %v1469 = vsub.f32 %v1467, %v1468
  %v1470 = vand.u32 %v1469, 4294901760
  %1471 = vmatmul.mubr.f32.gmra.mxu0 %v1470
  %v1472 = vpop.f32.mrf.mxu0
  %v1473 = vadd.f32 %v1315, %v1472
  %v1474 = vpop.f32.mrf.mxu0
  %v1475 = vand.u32 %v1328, 4294901760
  %v1476 = vsub.f32 %v1328, %v1475
  %v1477 = vand.u32 %v1476, 4294901760
  %v1478 = vsub.f32 %v1476, %v1477
  %v1479 = vand.u32 %v1478, 4294901760
  %1480 = vmatprep.mubr.f32.mxu0 %v1479
  %v1481 = vand.u32 %v1276, 4294901760
  %v1482 = vsub.f32 %v1276, %v1481
  %v1483 = vand.u32 %v1482, 4294901760
  %v1484 = vsub.f32 %v1482, %v1483
  %v1485 = vand.u32 %v1484, 4294901760
  %1486 = vmatmul.mubr.f32.gmra.mxu0 %v1485
  %v1487 = vpop.f32.mrf.mxu0
  %v1488 = vadd.f32 %v1315, %v1487
  %v1489 = vpop.f32.mrf.mxu0
  %v1490 = vand.u32 %v1331, 4294901760
  %v1491 = vsub.f32 %v1331, %v1490
  %v1492 = vand.u32 %v1491, 4294901760
  %v1493 = vsub.f32 %v1491, %v1492
  %v1494 = vand.u32 %v1493, 4294901760
  %1495 = vmatprep.mubr.f32.mxu0 %v1494
  %v1496 = vand.u32 %v1278, 4294901760
  %v1497 = vsub.f32 %v1278, %v1496
  %v1498 = vand.u32 %v1497, 4294901760
  %v1499 = vsub.f32 %v1497, %v1498
  %v1500 = vand.u32 %v1499, 4294901760
  %1501 = vmatmul.mubr.f32.gmra.mxu0 %v1500
  %v1502 = vpop.f32.mrf.mxu0
  %v1503 = vadd.f32 %v1315, %v1502
  %v1504 = vpop.f32.mrf.mxu0
  %v1505 = vand.u32 %v1334, 4294901760
  %v1506 = vsub.f32 %v1334, %v1505
  %v1507 = vand.u32 %v1506, 4294901760
  %v1508 = vsub.f32 %v1506, %v1507
  %v1509 = vand.u32 %v1508, 4294901760
  %1510 = vmatprep.mubr.f32.mxu0 %v1509
  %v1511 = vand.u32 %v1280, 4294901760
  %v1512 = vsub.f32 %v1280, %v1511
  %v1513 = vand.u32 %v1512, 4294901760
  %v1514 = vsub.f32 %v1512, %v1513
  %v1515 = vand.u32 %v1514, 4294901760
  %1516 = vmatmul.mubr.f32.gmra.mxu0 %v1515
  %v1517 = vpop.f32.mrf.mxu0
  %v1518 = vadd.f32 %v1315, %v1517
  %v1519 = vpop.f32.mrf.mxu0
  %v1520 = vand.u32 %v1337, 4294901760
  %v1521 = vsub.f32 %v1337, %v1520
  %v1522 = vand.u32 %v1521, 4294901760
  %v1523 = vsub.f32 %v1521, %v1522
  %v1524 = vand.u32 %v1523, 4294901760
  %1525 = vmatprep.mubr.f32.mxu0 %v1524
  %v1526 = vand.u32 %v1282, 4294901760
  %v1527 = vsub.f32 %v1282, %v1526
  %v1528 = vand.u32 %v1527, 4294901760
  %v1529 = vsub.f32 %v1527, %v1528
  %v1530 = vand.u32 %v1529, 4294901760
  %1531 = vmatmul.mubr.f32.gmra.mxu0 %v1530
  %v1532 = vpop.f32.mrf.mxu0
  %v1533 = vadd.f32 %v1315, %v1532
  %v1534 = vpop.f32.mrf.mxu0
  %v1535 = vand.u32 %v1340, 4294901760
  %v1536 = vsub.f32 %v1340, %v1535
  %v1537 = vand.u32 %v1536, 4294901760
  %v1538 = vsub.f32 %v1536, %v1537
  %v1539 = vand.u32 %v1538, 4294901760
  %1540 = vmatprep.mubr.f32.mxu0 %v1539
  %v1541 = vand.u32 %v1284, 4294901760
  %v1542 = vsub.f32 %v1284, %v1541
  %v1543 = vand.u32 %v1542, 4294901760
  %v1544 = vsub.f32 %v1542, %v1543
  %v1545 = vand.u32 %v1544, 4294901760
  %1546 = vmatmul.mubr.f32.gmra.mxu0 %v1545
  %v1547 = vpop.f32.mrf.mxu0
  %v1548 = vadd.f32 %v1315, %v1547
  %v1549 = vpop.f32.mrf.mxu0
  %1550 = vdwg.mxu0
  %1551 = vmatprep.subr.mxu0 0.0
  %v1552 = vand.u32 %v1301, 4294901760
  %v1553 = vsub.f32 %v1301, %v1552
  %v1554 = vand.u32 %v1553, 4294901760
  %v1555 = vsub.f32 %v1553, %v1554
  %v1556 = vand.u32 %v1555, 4294901760
  %1557 = vmatpush1.msra.mxu0 %v1556
  %1558 = vmatprep.subr.mxu0 0.0
  %v1559 = vand.u32 %v1300, 4294901760
  %v1560 = vsub.f32 %v1300, %v1559
  %v1561 = vand.u32 %v1560, 4294901760
  %v1562 = vsub.f32 %v1560, %v1561
  %v1563 = vand.u32 %v1562, 4294901760
  %1564 = vmatpush1.msra.mxu0 %v1563
  %1565 = vmatprep.subr.mxu0 0.0
  %v1566 = vand.u32 %v1299, 4294901760
  %v1567 = vsub.f32 %v1299, %v1566
  %v1568 = vand.u32 %v1567, 4294901760
  %v1569 = vsub.f32 %v1567, %v1568
  %v1570 = vand.u32 %v1569, 4294901760
  %1571 = vmatpush1.msra.mxu0 %v1570
  %1572 = vmatprep.subr.mxu0 0.0
  %v1573 = vand.u32 %v1298, 4294901760
  %v1574 = vsub.f32 %v1298, %v1573
  %v1575 = vand.u32 %v1574, 4294901760
  %v1576 = vsub.f32 %v1574, %v1575
  %v1577 = vand.u32 %v1576, 4294901760
  %1578 = vmatpush1.msra.mxu0 %v1577
  %1579 = vmatprep.subr.mxu0 0.0
  %v1580 = vand.u32 %v1297, 4294901760
  %v1581 = vsub.f32 %v1297, %v1580
  %v1582 = vand.u32 %v1581, 4294901760
  %v1583 = vsub.f32 %v1581, %v1582
  %v1584 = vand.u32 %v1583, 4294901760
  %1585 = vmatpush1.msra.mxu0 %v1584
  %1586 = vmatprep.subr.mxu0 0.0
  %v1587 = vand.u32 %v1296, 4294901760
  %v1588 = vsub.f32 %v1296, %v1587
  %v1589 = vand.u32 %v1588, 4294901760
  %v1590 = vsub.f32 %v1588, %v1589
  %v1591 = vand.u32 %v1590, 4294901760
  %1592 = vmatpush1.msra.mxu0 %v1591
  %1593 = vmatprep.subr.mxu0 0.0
  %v1594 = vand.u32 %v1295, 4294901760
  %v1595 = vsub.f32 %v1295, %v1594
  %v1596 = vand.u32 %v1595, 4294901760
  %v1597 = vsub.f32 %v1595, %v1596
  %v1598 = vand.u32 %v1597, 4294901760
  %1599 = vmatpush1.msra.mxu0 %v1598
  %1600 = vmatprep.subr.mxu0 0.0
  %v1601 = vand.u32 %v1294, 4294901760
  %v1602 = vsub.f32 %v1294, %v1601
  %v1603 = vand.u32 %v1602, 4294901760
  %v1604 = vsub.f32 %v1602, %v1603
  %v1605 = vand.u32 %v1604, 4294901760
  %1606 = vmatpush1.msra.mxu0 %v1605
  %1607 = vmatprep.subr.mxu0 0.0
  %v1608 = vand.u32 %v1293, 4294901760
  %v1609 = vsub.f32 %v1293, %v1608
  %v1610 = vand.u32 %v1609, 4294901760
  %v1611 = vsub.f32 %v1609, %v1610
  %v1612 = vand.u32 %v1611, 4294901760
  %1613 = vmatpush1.msra.mxu0 %v1612
  %1614 = vmatprep.subr.mxu0 0.0
  %v1615 = vand.u32 %v1292, 4294901760
  %v1616 = vsub.f32 %v1292, %v1615
  %v1617 = vand.u32 %v1616, 4294901760
  %v1618 = vsub.f32 %v1616, %v1617
  %v1619 = vand.u32 %v1618, 4294901760
  %1620 = vmatpush1.msra.mxu0 %v1619
  %1621 = vmatprep.subr.mxu0 0.0
  %v1622 = vand.u32 %v1291, 4294901760
  %v1623 = vsub.f32 %v1291, %v1622
  %v1624 = vand.u32 %v1623, 4294901760
  %v1625 = vsub.f32 %v1623, %v1624
  %v1626 = vand.u32 %v1625, 4294901760
  %1627 = vmatpush1.msra.mxu0 %v1626
  %1628 = vmatprep.subr.mxu0 0.0
  %v1629 = vand.u32 %v1290, 4294901760
  %v1630 = vsub.f32 %v1290, %v1629
  %v1631 = vand.u32 %v1630, 4294901760
  %v1632 = vsub.f32 %v1630, %v1631
  %v1633 = vand.u32 %v1632, 4294901760
  %1634 = vmatpush1.msra.mxu0 %v1633
  %1635 = vmatprep.subr.mxu0 0.0
  %v1636 = vand.u32 %v1289, 4294901760
  %v1637 = vsub.f32 %v1289, %v1636
  %v1638 = vand.u32 %v1637, 4294901760
  %v1639 = vsub.f32 %v1637, %v1638
  %v1640 = vand.u32 %v1639, 4294901760
  %1641 = vmatpush1.msra.mxu0 %v1640
  %1642 = vmatprep.subr.mxu0 0.0
  %v1643 = vand.u32 %v1288, 4294901760
  %v1644 = vsub.f32 %v1288, %v1643
  %v1645 = vand.u32 %v1644, 4294901760
  %v1646 = vsub.f32 %v1644, %v1645
  %v1647 = vand.u32 %v1646, 4294901760
  %1648 = vmatpush1.msra.mxu0 %v1647
  %1649 = vmatprep.subr.mxu0 0.0
  %v1650 = vand.u32 %v1287, 4294901760
  %v1651 = vsub.f32 %v1287, %v1650
  %v1652 = vand.u32 %v1651, 4294901760
  %v1653 = vsub.f32 %v1651, %v1652
  %v1654 = vand.u32 %v1653, 4294901760
  %1655 = vmatpush1.msra.mxu0 %v1654
  %1656 = vmatprep.subr.mxu0 0.0
  %v1657 = vand.u32 %v1286, 4294901760
  %v1658 = vsub.f32 %v1286, %v1657
  %v1659 = vand.u32 %v1658, 4294901760
  %v1660 = vsub.f32 %v1658, %v1659
  %v1661 = vand.u32 %v1660, 4294901760
  %1662 = vmatpush1.msra.mxu0 %v1661
  %1663 = vmatprep.subr.mxu0 0.0
  %1664 = vmatpush2.msra.mxu0 0.0
  %1665 = vmatprep.subr.mxu0 0.0
  %1666 = vmatpush2.msra.mxu0 0.0
  %1667 = vmatprep.subr.mxu0 0.0
  %1668 = vmatpush2.msra.mxu0 0.0
  %1669 = vmatprep.subr.mxu0 0.0
  %1670 = vmatpush2.msra.mxu0 0.0
  %1671 = vmatprep.subr.mxu0 0.0
  %1672 = vmatpush2.msra.mxu0 0.0
  %1673 = vmatprep.subr.mxu0 0.0
  %1674 = vmatpush2.msra.mxu0 0.0
  %1675 = vmatprep.subr.mxu0 0.0
  %1676 = vmatpush2.msra.mxu0 0.0
  %1677 = vmatprep.subr.mxu0 0.0
  %1678 = vmatpush2.msra.mxu0 0.0
  %1679 = vmatprep.subr.mxu0 0.0
  %v1680 = vand.u32 %v1309, 4294901760
  %v1681 = vsub.f32 %v1309, %v1680
  %v1682 = vand.u32 %v1681, 4294901760
  %v1683 = vsub.f32 %v1681, %v1682
  %v1684 = vand.u32 %v1683, 4294901760
  %1685 = vmatpush2.msra.mxu0 %v1684
  %1686 = vmatprep.subr.mxu0 0.0
  %v1687 = vand.u32 %v1308, 4294901760
  %v1688 = vsub.f32 %v1308, %v1687
  %v1689 = vand.u32 %v1688, 4294901760
  %v1690 = vsub.f32 %v1688, %v1689
  %v1691 = vand.u32 %v1690, 4294901760
  %1692 = vmatpush2.msra.mxu0 %v1691
  %1693 = vmatprep.subr.mxu0 0.0
  %v1694 = vand.u32 %v1307, 4294901760
  %v1695 = vsub.f32 %v1307, %v1694
  %v1696 = vand.u32 %v1695, 4294901760
  %v1697 = vsub.f32 %v1695, %v1696
  %v1698 = vand.u32 %v1697, 4294901760
  %1699 = vmatpush2.msra.mxu0 %v1698
  %1700 = vmatprep.subr.mxu0 0.0
  %v1701 = vand.u32 %v1306, 4294901760
  %v1702 = vsub.f32 %v1306, %v1701
  %v1703 = vand.u32 %v1702, 4294901760
  %v1704 = vsub.f32 %v1702, %v1703
  %v1705 = vand.u32 %v1704, 4294901760
  %1706 = vmatpush2.msra.mxu0 %v1705
  %1707 = vmatprep.subr.mxu0 0.0
  %v1708 = vand.u32 %v1305, 4294901760
  %v1709 = vsub.f32 %v1305, %v1708
  %v1710 = vand.u32 %v1709, 4294901760
  %v1711 = vsub.f32 %v1709, %v1710
  %v1712 = vand.u32 %v1711, 4294901760
  %1713 = vmatpush2.msra.mxu0 %v1712
  %1714 = vmatprep.subr.mxu0 0.0
  %v1715 = vand.u32 %v1304, 4294901760
  %v1716 = vsub.f32 %v1304, %v1715
  %v1717 = vand.u32 %v1716, 4294901760
  %v1718 = vsub.f32 %v1716, %v1717
  %v1719 = vand.u32 %v1718, 4294901760
  %1720 = vmatpush2.msra.mxu0 %v1719
  %1721 = vmatprep.subr.mxu0 0.0
  %v1722 = vand.u32 %v1303, 4294901760
  %v1723 = vsub.f32 %v1303, %v1722
  %v1724 = vand.u32 %v1723, 4294901760
  %v1725 = vsub.f32 %v1723, %v1724
  %v1726 = vand.u32 %v1725, 4294901760
  %1727 = vmatpush2.msra.mxu0 %v1726
  %1728 = vmatprep.subr.mxu0 0.0
  %v1729 = vand.u32 %v1302, 4294901760
  %v1730 = vsub.f32 %v1302, %v1729
  %v1731 = vand.u32 %v1730, 4294901760
  %v1732 = vsub.f32 %v1730, %v1731
  %v1733 = vand.u32 %v1732, 4294901760
  %1734 = vmatpush2.msra.mxu0 %v1733
  %v1735 = vand.u32 %v1319, 4294901760
  %1736 = vmatprep.mubr.f32.mxu0 %v1735
  %v1737 = vand.u32 %v1270, 4294901760
  %1738 = vmatmul.mubr.f32.gmra.mxu0 %v1737
  %v1739 = vpop.f32.mrf.mxu0
  %v1740 = vadd.f32 %v1443, %v1739
  %v1741 = vpop.f32.mrf.mxu0
  %v1742 = vand.u32 %v1322, 4294901760
  %1743 = vmatprep.mubr.f32.mxu0 %v1742
  %v1744 = vand.u32 %v1272, 4294901760
  %1745 = vmatmul.mubr.f32.gmra.mxu0 %v1744
  %v1746 = vpop.f32.mrf.mxu0
  %v1747 = vadd.f32 %v1458, %v1746
  %v1748 = vpop.f32.mrf.mxu0
  %v1749 = vand.u32 %v1325, 4294901760
  %1750 = vmatprep.mubr.f32.mxu0 %v1749
  %v1751 = vand.u32 %v1274, 4294901760
  %1752 = vmatmul.mubr.f32.gmra.mxu0 %v1751
  %v1753 = vpop.f32.mrf.mxu0
  %v1754 = vadd.f32 %v1473, %v1753
  %v1755 = vpop.f32.mrf.mxu0
  %v1756 = vand.u32 %v1328, 4294901760
  %1757 = vmatprep.mubr.f32.mxu0 %v1756
  %v1758 = vand.u32 %v1276, 4294901760
  %1759 = vmatmul.mubr.f32.gmra.mxu0 %v1758
  %v1760 = vpop.f32.mrf.mxu0
  %v1761 = vadd.f32 %v1488, %v1760
  %v1762 = vpop.f32.mrf.mxu0
  %v1763 = vand.u32 %v1331, 4294901760
  %1764 = vmatprep.mubr.f32.mxu0 %v1763
  %v1765 = vand.u32 %v1278, 4294901760
  %1766 = vmatmul.mubr.f32.gmra.mxu0 %v1765
  %v1767 = vpop.f32.mrf.mxu0
  %v1768 = vadd.f32 %v1503, %v1767
  %v1769 = vpop.f32.mrf.mxu0
  %v1770 = vand.u32 %v1334, 4294901760
  %1771 = vmatprep.mubr.f32.mxu0 %v1770
  %v1772 = vand.u32 %v1280, 4294901760
  %1773 = vmatmul.mubr.f32.gmra.mxu0 %v1772
  %v1774 = vpop.f32.mrf.mxu0
  %v1775 = vadd.f32 %v1518, %v1774
  %v1776 = vpop.f32.mrf.mxu0
  %v1777 = vand.u32 %v1337, 4294901760
  %1778 = vmatprep.mubr.f32.mxu0 %v1777
  %v1779 = vand.u32 %v1282, 4294901760
  %1780 = vmatmul.mubr.f32.gmra.mxu0 %v1779
  %v1781 = vpop.f32.mrf.mxu0
  %v1782 = vadd.f32 %v1533, %v1781
  %v1783 = vpop.f32.mrf.mxu0
  %v1784 = vand.u32 %v1340, 4294901760
  %1785 = vmatprep.mubr.f32.mxu0 %v1784
  %v1786 = vand.u32 %v1284, 4294901760
  %1787 = vmatmul.mubr.f32.gmra.mxu0 %v1786
  %v1788 = vpop.f32.mrf.mxu0
  %v1789 = vadd.f32 %v1548, %v1788
  %v1790 = vpop.f32.mrf.mxu0
  %1791 = vdwg.mxu0
  %1792 = vmatprep.subr.mxu0 0.0
  %v1793 = vand.u32 %v1301, 4294901760
  %v1794 = vsub.f32 %v1301, %v1793
  %1795 = vmatpush1.msra.mxu0 %v1794
  %1796 = vmatprep.subr.mxu0 0.0
  %v1797 = vand.u32 %v1300, 4294901760
  %v1798 = vsub.f32 %v1300, %v1797
  %1799 = vmatpush1.msra.mxu0 %v1798
  %1800 = vmatprep.subr.mxu0 0.0
  %v1801 = vand.u32 %v1299, 4294901760
  %v1802 = vsub.f32 %v1299, %v1801
  %1803 = vmatpush1.msra.mxu0 %v1802
  %1804 = vmatprep.subr.mxu0 0.0
  %v1805 = vand.u32 %v1298, 4294901760
  %v1806 = vsub.f32 %v1298, %v1805
  %1807 = vmatpush1.msra.mxu0 %v1806
  %1808 = vmatprep.subr.mxu0 0.0
  %v1809 = vand.u32 %v1297, 4294901760
  %v1810 = vsub.f32 %v1297, %v1809
  %1811 = vmatpush1.msra.mxu0 %v1810
  %1812 = vmatprep.subr.mxu0 0.0
  %v1813 = vand.u32 %v1296, 4294901760
  %v1814 = vsub.f32 %v1296, %v1813
  %1815 = vmatpush1.msra.mxu0 %v1814
  %1816 = vmatprep.subr.mxu0 0.0
  %v1817 = vand.u32 %v1295, 4294901760
  %v1818 = vsub.f32 %v1295, %v1817
  %1819 = vmatpush1.msra.mxu0 %v1818
  %1820 = vmatprep.subr.mxu0 0.0
  %v1821 = vand.u32 %v1294, 4294901760
  %v1822 = vsub.f32 %v1294, %v1821
  %1823 = vmatpush1.msra.mxu0 %v1822
  %1824 = vmatprep.subr.mxu0 0.0
  %v1825 = vand.u32 %v1293, 4294901760
  %v1826 = vsub.f32 %v1293, %v1825
  %1827 = vmatpush1.msra.mxu0 %v1826
  %1828 = vmatprep.subr.mxu0 0.0
  %v1829 = vand.u32 %v1292, 4294901760
  %v1830 = vsub.f32 %v1292, %v1829
  %1831 = vmatpush1.msra.mxu0 %v1830
  %1832 = vmatprep.subr.mxu0 0.0
  %v1833 = vand.u32 %v1291, 4294901760
  %v1834 = vsub.f32 %v1291, %v1833
  %1835 = vmatpush1.msra.mxu0 %v1834
  %1836 = vmatprep.subr.mxu0 0.0
  %v1837 = vand.u32 %v1290, 4294901760
  %v1838 = vsub.f32 %v1290, %v1837
  %1839 = vmatpush1.msra.mxu0 %v1838
  %1840 = vmatprep.subr.mxu0 0.0
  %v1841 = vand.u32 %v1289, 4294901760
  %v1842 = vsub.f32 %v1289, %v1841
  %1843 = vmatpush1.msra.mxu0 %v1842
  %1844 = vmatprep.subr.mxu0 0.0
  %v1845 = vand.u32 %v1288, 4294901760
  %v1846 = vsub.f32 %v1288, %v1845
  %1847 = vmatpush1.msra.mxu0 %v1846
  %1848 = vmatprep.subr.mxu0 0.0
  %v1849 = vand.u32 %v1287, 4294901760
  %v1850 = vsub.f32 %v1287, %v1849
  %1851 = vmatpush1.msra.mxu0 %v1850
  %1852 = vmatprep.subr.mxu0 0.0
  %v1853 = vand.u32 %v1286, 4294901760
  %v1854 = vsub.f32 %v1286, %v1853
  %1855 = vmatpush1.msra.mxu0 %v1854
  %1856 = vmatprep.subr.mxu0 0.0
  %1857 = vmatpush2.msra.mxu0 0.0
  %1858 = vmatprep.subr.mxu0 0.0
  %1859 = vmatpush2.msra.mxu0 0.0
  %1860 = vmatprep.subr.mxu0 0.0
  %1861 = vmatpush2.msra.mxu0 0.0
  %1862 = vmatprep.subr.mxu0 0.0
  %1863 = vmatpush2.msra.mxu0 0.0
  %1864 = vmatprep.subr.mxu0 0.0
  %1865 = vmatpush2.msra.mxu0 0.0
  %1866 = vmatprep.subr.mxu0 0.0
  %1867 = vmatpush2.msra.mxu0 0.0
  %1868 = vmatprep.subr.mxu0 0.0
  %1869 = vmatpush2.msra.mxu0 0.0
  %1870 = vmatprep.subr.mxu0 0.0
  %1871 = vmatpush2.msra.mxu0 0.0
  %1872 = vmatprep.subr.mxu0 0.0
  %v1873 = vand.u32 %v1309, 4294901760
  %v1874 = vsub.f32 %v1309, %v1873
  %1875 = vmatpush2.msra.mxu0 %v1874
  %1876 = vmatprep.subr.mxu0 0.0
  %v1877 = vand.u32 %v1308, 4294901760
  %v1878 = vsub.f32 %v1308, %v1877
  %1879 = vmatpush2.msra.mxu0 %v1878
  %1880 = vmatprep.subr.mxu0 0.0
  %v1881 = vand.u32 %v1307, 4294901760
  %v1882 = vsub.f32 %v1307, %v1881
  %1883 = vmatpush2.msra.mxu0 %v1882
  %1884 = vmatprep.subr.mxu0 0.0
  %v1885 = vand.u32 %v1306, 4294901760
  %v1886 = vsub.f32 %v1306, %v1885
  %1887 = vmatpush2.msra.mxu0 %v1886
  %1888 = vmatprep.subr.mxu0 0.0
  %v1889 = vand.u32 %v1305, 4294901760
  %v1890 = vsub.f32 %v1305, %v1889
  %1891 = vmatpush2.msra.mxu0 %v1890
  %1892 = vmatprep.subr.mxu0 0.0
  %v1893 = vand.u32 %v1304, 4294901760
  %v1894 = vsub.f32 %v1304, %v1893
  %1895 = vmatpush2.msra.mxu0 %v1894
  %1896 = vmatprep.subr.mxu0 0.0
  %v1897 = vand.u32 %v1303, 4294901760
  %v1898 = vsub.f32 %v1303, %v1897
  %1899 = vmatpush2.msra.mxu0 %v1898
  %1900 = vmatprep.subr.mxu0 0.0
  %v1901 = vand.u32 %v1302, 4294901760
  %v1902 = vsub.f32 %v1302, %v1901
  %1903 = vmatpush2.msra.mxu0 %v1902
  %v1904 = vand.u32 %v1319, 4294901760
  %v1905 = vsub.f32 %v1319, %v1904
  %1906 = vmatprep.mubr.f32.mxu0 %v1905
  %v1907 = vand.u32 %v1270, 4294901760
  %v1908 = vsub.f32 %v1270, %v1907
  %1909 = vmatmul.mubr.f32.gmra.mxu0 %v1908
  %v1910 = vpop.f32.mrf.mxu0
  %v1911 = vadd.f32 %v1740, %v1910
  %v1912 = vpop.f32.mrf.mxu0
  %v1913 = vand.u32 %v1322, 4294901760
  %v1914 = vsub.f32 %v1322, %v1913
  %1915 = vmatprep.mubr.f32.mxu0 %v1914
  %v1916 = vand.u32 %v1272, 4294901760
  %v1917 = vsub.f32 %v1272, %v1916
  %1918 = vmatmul.mubr.f32.gmra.mxu0 %v1917
  %v1919 = vpop.f32.mrf.mxu0
  %v1920 = vadd.f32 %v1747, %v1919
  %v1921 = vpop.f32.mrf.mxu0
  %v1922 = vand.u32 %v1325, 4294901760
  %v1923 = vsub.f32 %v1325, %v1922
  %1924 = vmatprep.mubr.f32.mxu0 %v1923
  %v1925 = vand.u32 %v1274, 4294901760
  %v1926 = vsub.f32 %v1274, %v1925
  %1927 = vmatmul.mubr.f32.gmra.mxu0 %v1926
  %v1928 = vpop.f32.mrf.mxu0
  %v1929 = vadd.f32 %v1754, %v1928
  %v1930 = vpop.f32.mrf.mxu0
  %v1931 = vand.u32 %v1328, 4294901760
  %v1932 = vsub.f32 %v1328, %v1931
  %1933 = vmatprep.mubr.f32.mxu0 %v1932
  %v1934 = vand.u32 %v1276, 4294901760
  %v1935 = vsub.f32 %v1276, %v1934
  %1936 = vmatmul.mubr.f32.gmra.mxu0 %v1935
  %v1937 = vpop.f32.mrf.mxu0
  %v1938 = vadd.f32 %v1761, %v1937
  %v1939 = vpop.f32.mrf.mxu0
  %v1940 = vand.u32 %v1331, 4294901760
  %v1941 = vsub.f32 %v1331, %v1940
  %1942 = vmatprep.mubr.f32.mxu0 %v1941
  %v1943 = vand.u32 %v1278, 4294901760
  %v1944 = vsub.f32 %v1278, %v1943
  %1945 = vmatmul.mubr.f32.gmra.mxu0 %v1944
  %v1946 = vpop.f32.mrf.mxu0
  %v1947 = vadd.f32 %v1768, %v1946
  %v1948 = vpop.f32.mrf.mxu0
  %v1949 = vand.u32 %v1334, 4294901760
  %v1950 = vsub.f32 %v1334, %v1949
  %1951 = vmatprep.mubr.f32.mxu0 %v1950
  %v1952 = vand.u32 %v1280, 4294901760
  %v1953 = vsub.f32 %v1280, %v1952
  %1954 = vmatmul.mubr.f32.gmra.mxu0 %v1953
  %v1955 = vpop.f32.mrf.mxu0
  %v1956 = vadd.f32 %v1775, %v1955
  %v1957 = vpop.f32.mrf.mxu0
  %v1958 = vand.u32 %v1337, 4294901760
  %v1959 = vsub.f32 %v1337, %v1958
  %1960 = vmatprep.mubr.f32.mxu0 %v1959
  %v1961 = vand.u32 %v1282, 4294901760
  %v1962 = vsub.f32 %v1282, %v1961
  %1963 = vmatmul.mubr.f32.gmra.mxu0 %v1962
  %v1964 = vpop.f32.mrf.mxu0
  %v1965 = vadd.f32 %v1782, %v1964
  %v1966 = vpop.f32.mrf.mxu0
  %v1967 = vand.u32 %v1340, 4294901760
  %v1968 = vsub.f32 %v1340, %v1967
  %1969 = vmatprep.mubr.f32.mxu0 %v1968
  %v1970 = vand.u32 %v1284, 4294901760
  %v1971 = vsub.f32 %v1284, %v1970
  %1972 = vmatmul.mubr.f32.gmra.mxu0 %v1971
  %v1973 = vpop.f32.mrf.mxu0
  %v1974 = vadd.f32 %v1789, %v1973
  %v1975 = vpop.f32.mrf.mxu0
  %1976 = vdwg.mxu0
  %1977 = vmatprep.subr.mxu0 0.0
  %v1978 = vand.u32 %v1301, 4294901760
  %1979 = vmatpush1.msra.mxu0 %v1978
  %1980 = vmatprep.subr.mxu0 0.0
  %v1981 = vand.u32 %v1300, 4294901760
  %1982 = vmatpush1.msra.mxu0 %v1981
  %1983 = vmatprep.subr.mxu0 0.0
  %v1984 = vand.u32 %v1299, 4294901760
  %1985 = vmatpush1.msra.mxu0 %v1984
  %1986 = vmatprep.subr.mxu0 0.0
  %v1987 = vand.u32 %v1298, 4294901760
  %1988 = vmatpush1.msra.mxu0 %v1987
  %1989 = vmatprep.subr.mxu0 0.0
  %v1990 = vand.u32 %v1297, 4294901760
  %1991 = vmatpush1.msra.mxu0 %v1990
  %1992 = vmatprep.subr.mxu0 0.0
  %v1993 = vand.u32 %v1296, 4294901760
  %1994 = vmatpush1.msra.mxu0 %v1993
  %1995 = vmatprep.subr.mxu0 0.0
  %v1996 = vand.u32 %v1295, 4294901760
  %1997 = vmatpush1.msra.mxu0 %v1996
  %1998 = vmatprep.subr.mxu0 0.0
  %v1999 = vand.u32 %v1294, 4294901760
  %2000 = vmatpush1.msra.mxu0 %v1999
  %2001 = vmatprep.subr.mxu0 0.0
  %v2002 = vand.u32 %v1293, 4294901760
  %2003 = vmatpush1.msra.mxu0 %v2002
  %2004 = vmatprep.subr.mxu0 0.0
  %v2005 = vand.u32 %v1292, 4294901760
  %2006 = vmatpush1.msra.mxu0 %v2005
  %2007 = vmatprep.subr.mxu0 0.0
  %v2008 = vand.u32 %v1291, 4294901760
  %2009 = vmatpush1.msra.mxu0 %v2008
  %2010 = vmatprep.subr.mxu0 0.0
  %v2011 = vand.u32 %v1290, 4294901760
  %2012 = vmatpush1.msra.mxu0 %v2011
  %2013 = vmatprep.subr.mxu0 0.0
  %v2014 = vand.u32 %v1289, 4294901760
  %2015 = vmatpush1.msra.mxu0 %v2014
  %2016 = vmatprep.subr.mxu0 0.0
  %v2017 = vand.u32 %v1288, 4294901760
  %2018 = vmatpush1.msra.mxu0 %v2017
  %2019 = vmatprep.subr.mxu0 0.0
  %v2020 = vand.u32 %v1287, 4294901760
  %2021 = vmatpush1.msra.mxu0 %v2020
  %2022 = vmatprep.subr.mxu0 0.0
  %v2023 = vand.u32 %v1286, 4294901760
  %2024 = vmatpush1.msra.mxu0 %v2023
  %2025 = vmatprep.subr.mxu0 0.0
  %2026 = vmatpush2.msra.mxu0 0.0
  %2027 = vmatprep.subr.mxu0 0.0
  %2028 = vmatpush2.msra.mxu0 0.0
  %2029 = vmatprep.subr.mxu0 0.0
  %2030 = vmatpush2.msra.mxu0 0.0
  %2031 = vmatprep.subr.mxu0 0.0
  %2032 = vmatpush2.msra.mxu0 0.0
  %2033 = vmatprep.subr.mxu0 0.0
  %2034 = vmatpush2.msra.mxu0 0.0
  %2035 = vmatprep.subr.mxu0 0.0
  %2036 = vmatpush2.msra.mxu0 0.0
  %2037 = vmatprep.subr.mxu0 0.0
  %2038 = vmatpush2.msra.mxu0 0.0
  %2039 = vmatprep.subr.mxu0 0.0
  %2040 = vmatpush2.msra.mxu0 0.0
  %2041 = vmatprep.subr.mxu0 0.0
  %v2042 = vand.u32 %v1309, 4294901760
  %2043 = vmatpush2.msra.mxu0 %v2042
  %2044 = vmatprep.subr.mxu0 0.0
  %v2045 = vand.u32 %v1308, 4294901760
  %2046 = vmatpush2.msra.mxu0 %v2045
  %2047 = vmatprep.subr.mxu0 0.0
  %v2048 = vand.u32 %v1307, 4294901760
  %2049 = vmatpush2.msra.mxu0 %v2048
  %2050 = vmatprep.subr.mxu0 0.0
  %v2051 = vand.u32 %v1306, 4294901760
  %2052 = vmatpush2.msra.mxu0 %v2051
  %2053 = vmatprep.subr.mxu0 0.0
  %v2054 = vand.u32 %v1305, 4294901760
  %2055 = vmatpush2.msra.mxu0 %v2054
  %2056 = vmatprep.subr.mxu0 0.0
  %v2057 = vand.u32 %v1304, 4294901760
  %2058 = vmatpush2.msra.mxu0 %v2057
  %2059 = vmatprep.subr.mxu0 0.0
  %v2060 = vand.u32 %v1303, 4294901760
  %2061 = vmatpush2.msra.mxu0 %v2060
  %2062 = vmatprep.subr.mxu0 0.0
  %v2063 = vand.u32 %v1302, 4294901760
  %2064 = vmatpush2.msra.mxu0 %v2063
  %v2065 = vand.u32 %v1319, 4294901760
  %v2066 = vsub.f32 %v1319, %v2065
  %v2067 = vand.u32 %v2066, 4294901760
  %2068 = vmatprep.mubr.f32.mxu0 %v2067
  %v2069 = vand.u32 %v1270, 4294901760
  %v2070 = vsub.f32 %v1270, %v2069
  %v2071 = vand.u32 %v2070, 4294901760
  %2072 = vmatmul.mubr.f32.gmra.mxu0 %v2071
  %v2073 = vpop.f32.mrf.mxu0
  %v2074 = vadd.f32 %v1911, %v2073
  %v2075 = vpop.f32.mrf.mxu0
  %v2076 = vand.u32 %v1322, 4294901760
  %v2077 = vsub.f32 %v1322, %v2076
  %v2078 = vand.u32 %v2077, 4294901760
  %2079 = vmatprep.mubr.f32.mxu0 %v2078
  %v2080 = vand.u32 %v1272, 4294901760
  %v2081 = vsub.f32 %v1272, %v2080
  %v2082 = vand.u32 %v2081, 4294901760
  %2083 = vmatmul.mubr.f32.gmra.mxu0 %v2082
  %v2084 = vpop.f32.mrf.mxu0
  %v2085 = vadd.f32 %v1920, %v2084
  %v2086 = vpop.f32.mrf.mxu0
  %v2087 = vand.u32 %v1325, 4294901760
  %v2088 = vsub.f32 %v1325, %v2087
  %v2089 = vand.u32 %v2088, 4294901760
  %2090 = vmatprep.mubr.f32.mxu0 %v2089
  %v2091 = vand.u32 %v1274, 4294901760
  %v2092 = vsub.f32 %v1274, %v2091
  %v2093 = vand.u32 %v2092, 4294901760
  %2094 = vmatmul.mubr.f32.gmra.mxu0 %v2093
  %v2095 = vpop.f32.mrf.mxu0
  %v2096 = vadd.f32 %v1929, %v2095
  %v2097 = vpop.f32.mrf.mxu0
  %v2098 = vand.u32 %v1328, 4294901760
  %v2099 = vsub.f32 %v1328, %v2098
  %v2100 = vand.u32 %v2099, 4294901760
  %2101 = vmatprep.mubr.f32.mxu0 %v2100
  %v2102 = vand.u32 %v1276, 4294901760
  %v2103 = vsub.f32 %v1276, %v2102
  %v2104 = vand.u32 %v2103, 4294901760
  %2105 = vmatmul.mubr.f32.gmra.mxu0 %v2104
  %v2106 = vpop.f32.mrf.mxu0
  %v2107 = vadd.f32 %v1938, %v2106
  %v2108 = vpop.f32.mrf.mxu0
  %v2109 = vand.u32 %v1331, 4294901760
  %v2110 = vsub.f32 %v1331, %v2109
  %v2111 = vand.u32 %v2110, 4294901760
  %2112 = vmatprep.mubr.f32.mxu0 %v2111
  %v2113 = vand.u32 %v1278, 4294901760
  %v2114 = vsub.f32 %v1278, %v2113
  %v2115 = vand.u32 %v2114, 4294901760
  %2116 = vmatmul.mubr.f32.gmra.mxu0 %v2115
  %v2117 = vpop.f32.mrf.mxu0
  %v2118 = vadd.f32 %v1947, %v2117
  %v2119 = vpop.f32.mrf.mxu0
  %v2120 = vand.u32 %v1334, 4294901760
  %v2121 = vsub.f32 %v1334, %v2120
  %v2122 = vand.u32 %v2121, 4294901760
  %2123 = vmatprep.mubr.f32.mxu0 %v2122
  %v2124 = vand.u32 %v1280, 4294901760
  %v2125 = vsub.f32 %v1280, %v2124
  %v2126 = vand.u32 %v2125, 4294901760
  %2127 = vmatmul.mubr.f32.gmra.mxu0 %v2126
  %v2128 = vpop.f32.mrf.mxu0
  %v2129 = vadd.f32 %v1956, %v2128
  %v2130 = vpop.f32.mrf.mxu0
  %v2131 = vand.u32 %v1337, 4294901760
  %v2132 = vsub.f32 %v1337, %v2131
  %v2133 = vand.u32 %v2132, 4294901760
  %2134 = vmatprep.mubr.f32.mxu0 %v2133
  %v2135 = vand.u32 %v1282, 4294901760
  %v2136 = vsub.f32 %v1282, %v2135
  %v2137 = vand.u32 %v2136, 4294901760
  %2138 = vmatmul.mubr.f32.gmra.mxu0 %v2137
  %v2139 = vpop.f32.mrf.mxu0
  %v2140 = vadd.f32 %v1965, %v2139
  %v2141 = vpop.f32.mrf.mxu0
  %v2142 = vand.u32 %v1340, 4294901760
  %v2143 = vsub.f32 %v1340, %v2142
  %v2144 = vand.u32 %v2143, 4294901760
  %2145 = vmatprep.mubr.f32.mxu0 %v2144
  %v2146 = vand.u32 %v1284, 4294901760
  %v2147 = vsub.f32 %v1284, %v2146
  %v2148 = vand.u32 %v2147, 4294901760
  %2149 = vmatmul.mubr.f32.gmra.mxu0 %v2148
  %v2150 = vpop.f32.mrf.mxu0
  %v2151 = vadd.f32 %v1974, %v2150
  %v2152 = vpop.f32.mrf.mxu0
  %2153 = vdwg.mxu0
  %2154 = vmatprep.subr.mxu0 0.0
  %v2155 = vand.u32 %v1301, 4294901760
  %v2156 = vsub.f32 %v1301, %v2155
  %v2157 = vand.u32 %v2156, 4294901760
  %2158 = vmatpush1.msra.mxu0 %v2157
  %2159 = vmatprep.subr.mxu0 0.0
  %v2160 = vand.u32 %v1300, 4294901760
  %v2161 = vsub.f32 %v1300, %v2160
  %v2162 = vand.u32 %v2161, 4294901760
  %2163 = vmatpush1.msra.mxu0 %v2162
  %2164 = vmatprep.subr.mxu0 0.0
  %v2165 = vand.u32 %v1299, 4294901760
  %v2166 = vsub.f32 %v1299, %v2165
  %v2167 = vand.u32 %v2166, 4294901760
  %2168 = vmatpush1.msra.mxu0 %v2167
  %2169 = vmatprep.subr.mxu0 0.0
  %v2170 = vand.u32 %v1298, 4294901760
  %v2171 = vsub.f32 %v1298, %v2170
  %v2172 = vand.u32 %v2171, 4294901760
  %2173 = vmatpush1.msra.mxu0 %v2172
  %2174 = vmatprep.subr.mxu0 0.0
  %v2175 = vand.u32 %v1297, 4294901760
  %v2176 = vsub.f32 %v1297, %v2175
  %v2177 = vand.u32 %v2176, 4294901760
  %2178 = vmatpush1.msra.mxu0 %v2177
  %2179 = vmatprep.subr.mxu0 0.0
  %v2180 = vand.u32 %v1296, 4294901760
  %v2181 = vsub.f32 %v1296, %v2180
  %v2182 = vand.u32 %v2181, 4294901760
  %2183 = vmatpush1.msra.mxu0 %v2182
  %2184 = vmatprep.subr.mxu0 0.0
  %v2185 = vand.u32 %v1295, 4294901760
  %v2186 = vsub.f32 %v1295, %v2185
  %v2187 = vand.u32 %v2186, 4294901760
  %2188 = vmatpush1.msra.mxu0 %v2187
  %2189 = vmatprep.subr.mxu0 0.0
  %v2190 = vand.u32 %v1294, 4294901760
  %v2191 = vsub.f32 %v1294, %v2190
  %v2192 = vand.u32 %v2191, 4294901760
  %2193 = vmatpush1.msra.mxu0 %v2192
  %2194 = vmatprep.subr.mxu0 0.0
  %v2195 = vand.u32 %v1293, 4294901760
  %v2196 = vsub.f32 %v1293, %v2195
  %v2197 = vand.u32 %v2196, 4294901760
  %2198 = vmatpush1.msra.mxu0 %v2197
  %2199 = vmatprep.subr.mxu0 0.0
  %v2200 = vand.u32 %v1292, 4294901760
  %v2201 = vsub.f32 %v1292, %v2200
  %v2202 = vand.u32 %v2201, 4294901760
  %2203 = vmatpush1.msra.mxu0 %v2202
  %2204 = vmatprep.subr.mxu0 0.0
  %v2205 = vand.u32 %v1291, 4294901760
  %v2206 = vsub.f32 %v1291, %v2205
  %v2207 = vand.u32 %v2206, 4294901760
  %2208 = vmatpush1.msra.mxu0 %v2207
  %2209 = vmatprep.subr.mxu0 0.0
  %v2210 = vand.u32 %v1290, 4294901760
  %v2211 = vsub.f32 %v1290, %v2210
  %v2212 = vand.u32 %v2211, 4294901760
  %2213 = vmatpush1.msra.mxu0 %v2212
  %2214 = vmatprep.subr.mxu0 0.0
  %v2215 = vand.u32 %v1289, 4294901760
  %v2216 = vsub.f32 %v1289, %v2215
  %v2217 = vand.u32 %v2216, 4294901760
  %2218 = vmatpush1.msra.mxu0 %v2217
  %2219 = vmatprep.subr.mxu0 0.0
  %v2220 = vand.u32 %v1288, 4294901760
  %v2221 = vsub.f32 %v1288, %v2220
  %v2222 = vand.u32 %v2221, 4294901760
  %2223 = vmatpush1.msra.mxu0 %v2222
  %2224 = vmatprep.subr.mxu0 0.0
  %v2225 = vand.u32 %v1287, 4294901760
  %v2226 = vsub.f32 %v1287, %v2225
  %v2227 = vand.u32 %v2226, 4294901760
  %2228 = vmatpush1.msra.mxu0 %v2227
  %2229 = vmatprep.subr.mxu0 0.0
  %v2230 = vand.u32 %v1286, 4294901760
  %v2231 = vsub.f32 %v1286, %v2230
  %v2232 = vand.u32 %v2231, 4294901760
  %2233 = vmatpush1.msra.mxu0 %v2232
  %2234 = vmatprep.subr.mxu0 0.0
  %2235 = vmatpush2.msra.mxu0 0.0
  %2236 = vmatprep.subr.mxu0 0.0
  %2237 = vmatpush2.msra.mxu0 0.0
  %2238 = vmatprep.subr.mxu0 0.0
  %2239 = vmatpush2.msra.mxu0 0.0
  %2240 = vmatprep.subr.mxu0 0.0
  %2241 = vmatpush2.msra.mxu0 0.0
  %2242 = vmatprep.subr.mxu0 0.0
  %2243 = vmatpush2.msra.mxu0 0.0
  %2244 = vmatprep.subr.mxu0 0.0
  %2245 = vmatpush2.msra.mxu0 0.0
  %2246 = vmatprep.subr.mxu0 0.0
  %2247 = vmatpush2.msra.mxu0 0.0
  %2248 = vmatprep.subr.mxu0 0.0
  %2249 = vmatpush2.msra.mxu0 0.0
  %2250 = vmatprep.subr.mxu0 0.0
  %v2251 = vand.u32 %v1309, 4294901760
  %v2252 = vsub.f32 %v1309, %v2251
  %v2253 = vand.u32 %v2252, 4294901760
  %2254 = vmatpush2.msra.mxu0 %v2253
  %2255 = vmatprep.subr.mxu0 0.0
  %v2256 = vand.u32 %v1308, 4294901760
  %v2257 = vsub.f32 %v1308, %v2256
  %v2258 = vand.u32 %v2257, 4294901760
  %2259 = vmatpush2.msra.mxu0 %v2258
  %2260 = vmatprep.subr.mxu0 0.0
  %v2261 = vand.u32 %v1307, 4294901760
  %v2262 = vsub.f32 %v1307, %v2261
  %v2263 = vand.u32 %v2262, 4294901760
  %2264 = vmatpush2.msra.mxu0 %v2263
  %2265 = vmatprep.subr.mxu0 0.0
  %v2266 = vand.u32 %v1306, 4294901760
  %v2267 = vsub.f32 %v1306, %v2266
  %v2268 = vand.u32 %v2267, 4294901760
  %2269 = vmatpush2.msra.mxu0 %v2268
  %2270 = vmatprep.subr.mxu0 0.0
  %v2271 = vand.u32 %v1305, 4294901760
  %v2272 = vsub.f32 %v1305, %v2271
  %v2273 = vand.u32 %v2272, 4294901760
  %2274 = vmatpush2.msra.mxu0 %v2273
  %2275 = vmatprep.subr.mxu0 0.0
  %v2276 = vand.u32 %v1304, 4294901760
  %v2277 = vsub.f32 %v1304, %v2276
  %v2278 = vand.u32 %v2277, 4294901760
  %2279 = vmatpush2.msra.mxu0 %v2278
  %2280 = vmatprep.subr.mxu0 0.0
  %v2281 = vand.u32 %v1303, 4294901760
  %v2282 = vsub.f32 %v1303, %v2281
  %v2283 = vand.u32 %v2282, 4294901760
  %2284 = vmatpush2.msra.mxu0 %v2283
  %2285 = vmatprep.subr.mxu0 0.0
  %v2286 = vand.u32 %v1302, 4294901760
  %v2287 = vsub.f32 %v1302, %v2286
  %v2288 = vand.u32 %v2287, 4294901760
  %2289 = vmatpush2.msra.mxu0 %v2288
  %v2290 = vand.u32 %v1319, 4294901760
  %2291 = vmatprep.mubr.f32.mxu0 %v2290
  %v2292 = vand.u32 %v1270, 4294901760
  %2293 = vmatmul.mubr.f32.gmra.mxu0 %v2292
  %v2294 = vpop.f32.mrf.mxu0
  %v2295 = vadd.f32 %v2074, %v2294
  %v2296 = vpop.f32.mrf.mxu0
  %v2297 = vand.u32 %v1322, 4294901760
  %2298 = vmatprep.mubr.f32.mxu0 %v2297
  %v2299 = vand.u32 %v1272, 4294901760
  %2300 = vmatmul.mubr.f32.gmra.mxu0 %v2299
  %v2301 = vpop.f32.mrf.mxu0
  %v2302 = vadd.f32 %v2085, %v2301
  %v2303 = vpop.f32.mrf.mxu0
  %v2304 = vand.u32 %v1325, 4294901760
  %2305 = vmatprep.mubr.f32.mxu0 %v2304
  %v2306 = vand.u32 %v1274, 4294901760
  %2307 = vmatmul.mubr.f32.gmra.mxu0 %v2306
  %v2308 = vpop.f32.mrf.mxu0
  %v2309 = vadd.f32 %v2096, %v2308
  %v2310 = vpop.f32.mrf.mxu0
  %v2311 = vand.u32 %v1328, 4294901760
  %2312 = vmatprep.mubr.f32.mxu0 %v2311
  %v2313 = vand.u32 %v1276, 4294901760
  %2314 = vmatmul.mubr.f32.gmra.mxu0 %v2313
  %v2315 = vpop.f32.mrf.mxu0
  %v2316 = vadd.f32 %v2107, %v2315
  %v2317 = vpop.f32.mrf.mxu0
  %v2318 = vand.u32 %v1331, 4294901760
  %2319 = vmatprep.mubr.f32.mxu0 %v2318
  %v2320 = vand.u32 %v1278, 4294901760
  %2321 = vmatmul.mubr.f32.gmra.mxu0 %v2320
  %v2322 = vpop.f32.mrf.mxu0
  %v2323 = vadd.f32 %v2118, %v2322
  %v2324 = vpop.f32.mrf.mxu0
  %v2325 = vand.u32 %v1334, 4294901760
  %2326 = vmatprep.mubr.f32.mxu0 %v2325
  %v2327 = vand.u32 %v1280, 4294901760
  %2328 = vmatmul.mubr.f32.gmra.mxu0 %v2327
  %v2329 = vpop.f32.mrf.mxu0
  %v2330 = vadd.f32 %v2129, %v2329
  %v2331 = vpop.f32.mrf.mxu0
  %v2332 = vand.u32 %v1337, 4294901760
  %2333 = vmatprep.mubr.f32.mxu0 %v2332
  %v2334 = vand.u32 %v1282, 4294901760
  %2335 = vmatmul.mubr.f32.gmra.mxu0 %v2334
  %v2336 = vpop.f32.mrf.mxu0
  %v2337 = vadd.f32 %v2140, %v2336
  %v2338 = vpop.f32.mrf.mxu0
  %v2339 = vand.u32 %v1340, 4294901760
  %2340 = vmatprep.mubr.f32.mxu0 %v2339
  %v2341 = vand.u32 %v1284, 4294901760
  %2342 = vmatmul.mubr.f32.gmra.mxu0 %v2341
  %v2343 = vpop.f32.mrf.mxu0
  %v2344 = vadd.f32 %v2151, %v2343
  %v2345 = vpop.f32.mrf.mxu0
  %2346 = vdwg.mxu0
  %2347 = vmatprep.subr.mxu0 0.0
  %v2348 = vand.u32 %v1301, 4294901760
  %2349 = vmatpush1.msra.mxu0 %v2348
  %2350 = vmatprep.subr.mxu0 0.0
  %v2351 = vand.u32 %v1300, 4294901760
  %2352 = vmatpush1.msra.mxu0 %v2351
  %2353 = vmatprep.subr.mxu0 0.0
  %v2354 = vand.u32 %v1299, 4294901760
  %2355 = vmatpush1.msra.mxu0 %v2354
  %2356 = vmatprep.subr.mxu0 0.0
  %v2357 = vand.u32 %v1298, 4294901760
  %2358 = vmatpush1.msra.mxu0 %v2357
  %2359 = vmatprep.subr.mxu0 0.0
  %v2360 = vand.u32 %v1297, 4294901760
  %2361 = vmatpush1.msra.mxu0 %v2360
  %2362 = vmatprep.subr.mxu0 0.0
  %v2363 = vand.u32 %v1296, 4294901760
  %2364 = vmatpush1.msra.mxu0 %v2363
  %2365 = vmatprep.subr.mxu0 0.0
  %v2366 = vand.u32 %v1295, 4294901760
  %2367 = vmatpush1.msra.mxu0 %v2366
  %2368 = vmatprep.subr.mxu0 0.0
  %v2369 = vand.u32 %v1294, 4294901760
  %2370 = vmatpush1.msra.mxu0 %v2369
  %2371 = vmatprep.subr.mxu0 0.0
  %v2372 = vand.u32 %v1293, 4294901760
  %2373 = vmatpush1.msra.mxu0 %v2372
  %2374 = vmatprep.subr.mxu0 0.0
  %v2375 = vand.u32 %v1292, 4294901760
  %2376 = vmatpush1.msra.mxu0 %v2375
  %2377 = vmatprep.subr.mxu0 0.0
  %v2378 = vand.u32 %v1291, 4294901760
  %2379 = vmatpush1.msra.mxu0 %v2378
  %2380 = vmatprep.subr.mxu0 0.0
  %v2381 = vand.u32 %v1290, 4294901760
  %2382 = vmatpush1.msra.mxu0 %v2381
  %2383 = vmatprep.subr.mxu0 0.0
  %v2384 = vand.u32 %v1289, 4294901760
  %2385 = vmatpush1.msra.mxu0 %v2384
  %2386 = vmatprep.subr.mxu0 0.0
  %v2387 = vand.u32 %v1288, 4294901760
  %2388 = vmatpush1.msra.mxu0 %v2387
  %2389 = vmatprep.subr.mxu0 0.0
  %v2390 = vand.u32 %v1287, 4294901760
  %2391 = vmatpush1.msra.mxu0 %v2390
  %2392 = vmatprep.subr.mxu0 0.0
  %v2393 = vand.u32 %v1286, 4294901760
  %2394 = vmatpush1.msra.mxu0 %v2393
  %2395 = vmatprep.subr.mxu0 0.0
  %2396 = vmatpush2.msra.mxu0 0.0
  %2397 = vmatprep.subr.mxu0 0.0
  %2398 = vmatpush2.msra.mxu0 0.0
  %2399 = vmatprep.subr.mxu0 0.0
  %2400 = vmatpush2.msra.mxu0 0.0
  %2401 = vmatprep.subr.mxu0 0.0
  %2402 = vmatpush2.msra.mxu0 0.0
  %2403 = vmatprep.subr.mxu0 0.0
  %2404 = vmatpush2.msra.mxu0 0.0
  %2405 = vmatprep.subr.mxu0 0.0
  %2406 = vmatpush2.msra.mxu0 0.0
  %2407 = vmatprep.subr.mxu0 0.0
  %2408 = vmatpush2.msra.mxu0 0.0
  %2409 = vmatprep.subr.mxu0 0.0
  %2410 = vmatpush2.msra.mxu0 0.0
  %2411 = vmatprep.subr.mxu0 0.0
  %v2412 = vand.u32 %v1309, 4294901760
  %2413 = vmatpush2.msra.mxu0 %v2412
  %2414 = vmatprep.subr.mxu0 0.0
  %v2415 = vand.u32 %v1308, 4294901760
  %2416 = vmatpush2.msra.mxu0 %v2415
  %2417 = vmatprep.subr.mxu0 0.0
  %v2418 = vand.u32 %v1307, 4294901760
  %2419 = vmatpush2.msra.mxu0 %v2418
  %2420 = vmatprep.subr.mxu0 0.0
  %v2421 = vand.u32 %v1306, 4294901760
  %2422 = vmatpush2.msra.mxu0 %v2421
  %2423 = vmatprep.subr.mxu0 0.0
  %v2424 = vand.u32 %v1305, 4294901760
  %2425 = vmatpush2.msra.mxu0 %v2424
  %2426 = vmatprep.subr.mxu0 0.0
  %v2427 = vand.u32 %v1304, 4294901760
  %2428 = vmatpush2.msra.mxu0 %v2427
  %2429 = vmatprep.subr.mxu0 0.0
  %v2430 = vand.u32 %v1303, 4294901760
  %2431 = vmatpush2.msra.mxu0 %v2430
  %2432 = vmatprep.subr.mxu0 0.0
  %v2433 = vand.u32 %v1302, 4294901760
  %2434 = vmatpush2.msra.mxu0 %v2433
  %v2435 = vand.u32 %v1319, 4294901760
  %2436 = vmatprep.mubr.f32.mxu0 %v2435
  %v2437 = vand.u32 %v1270, 4294901760
  %2438 = vmatmul.mubr.f32.gmra.mxu0 %v2437
  %v2439 = vpop.f32.mrf.mxu0
  %v2440 = vadd.f32 %v2295, %v2439
  %v2441 = vpop.f32.mrf.mxu0
  %v2442 = vand.u32 %v1322, 4294901760
  %2443 = vmatprep.mubr.f32.mxu0 %v2442
  %v2444 = vand.u32 %v1272, 4294901760
  %2445 = vmatmul.mubr.f32.gmra.mxu0 %v2444
  %v2446 = vpop.f32.mrf.mxu0
  %v2447 = vadd.f32 %v2302, %v2446
  %v2448 = vpop.f32.mrf.mxu0
  %v2449 = vand.u32 %v1325, 4294901760
  %2450 = vmatprep.mubr.f32.mxu0 %v2449
  %v2451 = vand.u32 %v1274, 4294901760
  %2452 = vmatmul.mubr.f32.gmra.mxu0 %v2451
  %v2453 = vpop.f32.mrf.mxu0
  %v2454 = vadd.f32 %v2309, %v2453
  %v2455 = vpop.f32.mrf.mxu0
  %v2456 = vand.u32 %v1328, 4294901760
  %2457 = vmatprep.mubr.f32.mxu0 %v2456
  %v2458 = vand.u32 %v1276, 4294901760
  %2459 = vmatmul.mubr.f32.gmra.mxu0 %v2458
  %v2460 = vpop.f32.mrf.mxu0
  %v2461 = vadd.f32 %v2316, %v2460
  %v2462 = vpop.f32.mrf.mxu0
  %v2463 = vand.u32 %v1331, 4294901760
  %2464 = vmatprep.mubr.f32.mxu0 %v2463
  %v2465 = vand.u32 %v1278, 4294901760
  %2466 = vmatmul.mubr.f32.gmra.mxu0 %v2465
  %v2467 = vpop.f32.mrf.mxu0
  %v2468 = vadd.f32 %v2323, %v2467
  %v2469 = vpop.f32.mrf.mxu0
  %v2470 = vand.u32 %v1334, 4294901760
  %2471 = vmatprep.mubr.f32.mxu0 %v2470
  %v2472 = vand.u32 %v1280, 4294901760
  %2473 = vmatmul.mubr.f32.gmra.mxu0 %v2472
  %v2474 = vpop.f32.mrf.mxu0
  %v2475 = vadd.f32 %v2330, %v2474
  %v2476 = vpop.f32.mrf.mxu0
  %v2477 = vand.u32 %v1337, 4294901760
  %2478 = vmatprep.mubr.f32.mxu0 %v2477
  %v2479 = vand.u32 %v1282, 4294901760
  %2480 = vmatmul.mubr.f32.gmra.mxu0 %v2479
  %v2481 = vpop.f32.mrf.mxu0
  %v2482 = vadd.f32 %v2337, %v2481
  %v2483 = vpop.f32.mrf.mxu0
  %v2484 = vand.u32 %v1340, 4294901760
  %2485 = vmatprep.mubr.f32.mxu0 %v2484
  %v2486 = vand.u32 %v1284, 4294901760
  %2487 = vmatmul.mubr.f32.gmra.mxu0 %v2486
  %v2488 = vpop.f32.mrf.mxu0
  %v2489 = vadd.f32 %v2344, %v2488
  %v2490 = vpop.f32.mrf.mxu0
  %2491 = vdwg.mxu0
  %v2492 = vxor.u32 %v2440, 2147483648
  %v2493 = vxor.u32 %v2447, 2147483648
  %v2494 = vxor.u32 %v2454, 2147483648
  %v2495 = vxor.u32 %v2461, 2147483648
  %v2496 = vxor.u32 %v2468, 2147483648
  %v2497 = vxor.u32 %v2475, 2147483648
  %v2498 = vxor.u32 %v2482, 2147483648
  %v2499 = vxor.u32 %v2489, 2147483648
  %v2500 = vmul.f32 %v2492, 1.442695
  %v2501 = vpow.pop %v2500
  %v2502 = vmul.f32 %v2493, 1.442695
  %v2503 = vpow.pop %v2502
  %v2504 = vmul.f32 %v2494, 1.442695
  %v2505 = vpow.pop %v2504
  %v2506 = vmul.f32 %v2495, 1.442695
  %v2507 = vpow.pop %v2506
  %v2508 = vmul.f32 %v2496, 1.442695
  %v2509 = vpow.pop %v2508
  %v2510 = vmul.f32 %v2497, 1.442695
  %v2511 = vpow.pop %v2510
  %v2512 = vmul.f32 %v2498, 1.442695
  %v2513 = vpow.pop %v2512
  %v2514 = vmul.f32 %v2499, 1.442695
  %v2515 = vpow.pop %v2514
  %v2516 = vadd.f32 %v2501, 1.0
  %v2517 = vadd.f32 %v2503, 1.0
  %v2518 = vadd.f32 %v2505, 1.0
  %v2519 = vadd.f32 %v2507, 1.0
  %v2520 = vadd.f32 %v2509, 1.0
  %v2521 = vadd.f32 %v2511, 1.0
  %v2522 = vadd.f32 %v2513, 1.0
  %v2523 = vadd.f32 %v2515, 1.0
  %v2524 = vrcp.pop %v2516
  %v2525 = vmul.f32 1.0, %v2524
  %v2526 = vrcp.pop %v2517
  %v2527 = vmul.f32 1.0, %v2526
  %v2528 = vrcp.pop %v2518
  %v2529 = vmul.f32 1.0, %v2528
  %v2530 = vrcp.pop %v2519
  %v2531 = vmul.f32 1.0, %v2530
  %v2532 = vrcp.pop %v2520
  %v2533 = vmul.f32 1.0, %v2532
  %v2534 = vrcp.pop %v2521
  %v2535 = vmul.f32 1.0, %v2534
  %v2536 = vrcp.pop %v2522
  %v2537 = vmul.f32 1.0, %v2536
  %v2538 = vrcp.pop %v2523
  %v2539 = vmul.f32 1.0, %v2538
  %2540 = vst [vmem:[%s5] sm:$0xff] %v2525
  %2541 = vst [vmem:[%s5 + $0x8] sm:$0xff] %v2527
  %2542 = vst [vmem:[%s5 + $0x10] sm:$0xff] %v2529
  %2543 = vst [vmem:[%s5 + $0x18] sm:$0xff] %v2531
  %2544 = vst [vmem:[%s5 + $0x20] sm:$0xff] %v2533
  %2545 = vst [vmem:[%s5 + $0x28] sm:$0xff] %v2535
  %2546 = vst [vmem:[%s5 + $0x30] sm:$0xff] %v2537
  %2547 = vst [vmem:[%s5 + $0x38] sm:$0xff] %v2539
  // Predicated region
  $region22: #{decoder_forward.1} parent=0 // pred_check
    _
  $region23: #{decoder_forward.1} parent=0 // pred_check_branch
    %2549 = sbr.rel (0) target = $region25
  $region24: #{decoder_forward.1} parent=0 // pred_region
    _
  $region25: #{decoder_forward.1} parent=0 // pred_fallthru
    _
  // Predicated region
  $region26: #{decoder_forward.1} parent=0 // pred_check
    _
  $region27: #{decoder_forward.1} parent=0 // pred_check_branch
    %2551 = sbr.rel (0) target = $region29
  $region28: #{decoder_forward.1} parent=0 // pred_region
    _
  $region29: #{decoder_forward.1} parent=0 // pred_fallthru
    _

</llo_original>
